<compile_context>
chip_gen: v6e
topology: v6e:2x2x1
jax: 0.10.0
libtpu: 0.0.40
codegen_flags: <defaults>
</compile_context>

<pallas_src>
import math

import jax
import jax.numpy as jnp
from jax import lax
from jax.experimental import pallas as pl
from jax.experimental.pallas import tpu as pltpu

BN_EPS = 1e-5
_INV_SQRT2 = 1.0 / math.sqrt(2.0)


def _dwconv_kernel(x_ref, scale_ref, shift_ref, w_ref, o_ref):
    """One grid step == one (channel-block, batch) tile, channels-last.

    x_ref     : (1, H, W, CT)  input tile (native dtype, VMEM)
    scale_ref : (1, 1, CT)     folded BN scale  = gamma * rsqrt(var + eps)
    shift_ref : (1, 1, CT)     folded BN shift  = beta - mean * scale
    w_ref     : (3, 3, CT)     depthwise 3x3 weights, channel on lanes
    o_ref     : (1, H, W, CT)  output tile (VMEM)
    """
    _, H, W, CT = x_ref.shape

    x = x_ref[0].astype(jnp.float32)                       # (H, W, CT)

    # --- BatchNorm (inference) folded into a single FMA (lane vectors) ---
    y = x * scale_ref[...] + shift_ref[...]

    # --- exact GELU (erf based, matches nn.GELU()) ---
    y = 0.5 * y * (1.0 + lax.erf(y * _INV_SQRT2))

    w = w_ref[...].astype(jnp.float32)                     # (3, 3, CT)

    # --- horizontal (W / sublane) shifted views via XLU roll + border mask ---
    col = lax.broadcasted_iota(jnp.int32, (1, W, 1), 1)
    y_l = jnp.where(col == 0, 0.0, pltpu.roll(y, shift=1, axis=1))       # y[:, w-1, :]
    y_r = jnp.where(col == W - 1, 0.0, pltpu.roll(y, shift=W - 1, axis=1))  # y[:, w+1, :]

    # --- per-kernel-row horizontal combinations (VPU, f32) ---
    r0 = y_l * w[0, 0] + y * w[0, 1] + y_r * w[0, 2]       # applied at row h-1
    r1 = y_l * w[1, 0] + y * w[1, 1] + y_r * w[1, 2]       # applied at row h
    r2 = y_l * w[2, 0] + y * w[2, 1] + y_r * w[2, 2]       # applied at row h+1

    # --- vertical (H / leading-dim) shifts: out[h] = r0[h-1] + r1[h] + r2[h+1] ---
    zrow = jnp.zeros((1, W, CT), jnp.float32)
    acc = r1
    acc = acc + jnp.concatenate([zrow, r0[:-1]], axis=0)
    acc = acc + jnp.concatenate([r2[1:], zrow], axis=0)

    o_ref[0] = acc.astype(o_ref.dtype)


def _vmem_capacity_bytes():
    try:
        return int(pltpu.get_tpu_info().vmem_capacity_bytes)
    except Exception:
        return 64 * 1024 * 1024        # conservative (v7x per-core) fallback


def _vmem_limit_bytes():
    cap = _vmem_capacity_bytes()
    # leave headroom for Mosaic internal scratch; cap at 100 MiB on big-VMEM parts
    return int(min(max(cap - 16 * 1024 * 1024, 32 * 1024 * 1024), 100 * 1024 * 1024))


def _pick_channel_tile(Cp, H, W, in_itemsize, out_itemsize):
    """Largest multiple-of-128 divisor of Cp whose (padded) working set fits."""
    budget = min(_vmem_capacity_bytes() // 3, 24 * 1024 * 1024)
    Wp = -(-W // 8) * 8                 # sublane-padded W (lanes carry channels)

    def footprint(ct):
        tile = H * Wp * ct
        io = tile * (in_itemsize + out_itemsize) * 2     # double-buffered in/out
        tmp = tile * 4 * 6                               # f32 in-kernel temporaries
        params = ct * (2 + 9) * 4 * 2                    # scale/shift + 3x3 weights
        return io + tmp + params

    best = 128
    for ct in range(128, Cp + 1, 128):
        if Cp % ct == 0 and footprint(ct) <= budget:
            best = ct
    return best


def depthwise_conv_forward(x_nchw, gamma, beta, running_mean, running_var,
                           conv_weight):
    """Forward pass of DepthWise_Conv (NCHW in / NCHW out)."""
    B, C, H, W = x_nchw.shape
    out_dtype = x_nchw.dtype
    Cp = -(-C // 128) * 128

    # NCHW -> NHWC (channels on lanes), pad channels to a multiple of 128.
    x = jnp.transpose(x_nchw, (0, 2, 3, 1))
    if Cp != C:
        x = jnp.pad(x, ((0, 0), (0, 0), (0, 0), (0, Cp - C)))

    # Fold BatchNorm (inference) into per-channel scale/shift, channel on lanes.
    inv_std = lax.rsqrt(running_var.astype(jnp.float32) + BN_EPS)
    scale = gamma.astype(jnp.float32) * inv_std
    shift = beta.astype(jnp.float32) - running_mean.astype(jnp.float32) * scale
    scale = jnp.pad(scale, (0, Cp - C)).reshape(1, 1, Cp)
    shift = jnp.pad(shift, (0, Cp - C)).reshape(1, 1, Cp)

    # (C, 1, 3, 3) -> (3, 3, Cp): spatial taps leading, channel on lanes.
    w = jnp.transpose(conv_weight[:, 0].astype(jnp.float32), (1, 2, 0))
    w = jnp.pad(w, ((0, 0), (0, 0), (0, Cp - C)))

    CT = _pick_channel_tile(Cp, H, W, x.dtype.itemsize,
                            jnp.dtype(out_dtype).itemsize)
    grid = (Cp // CT, B)               # batch innermost: params not re-DMA'd

    out = pl.pallas_call(
        _dwconv_kernel,
        out_shape=jax.ShapeDtypeStruct((B, H, W, Cp), out_dtype),
        grid_spec=pltpu.PrefetchScalarGridSpec(
            num_scalar_prefetch=0,
            grid=grid,
            in_specs=[
                pl.BlockSpec((1, H, W, CT), lambda c, b: (b, 0, 0, c)),
                pl.BlockSpec((1, 1, CT), lambda c, b: (0, 0, c)),
                pl.BlockSpec((1, 1, CT), lambda c, b: (0, 0, c)),
                pl.BlockSpec((3, 3, CT), lambda c, b: (0, 0, c)),
            ],
            out_specs=pl.BlockSpec((1, H, W, CT), lambda c, b: (b, 0, 0, c)),
        ),
        compiler_params=pltpu.CompilerParams(
            dimension_semantics=("parallel", "parallel"),
            vmem_limit_bytes=_vmem_limit_bytes()),
    )(x, scale, shift, w)

    # NHWC -> NCHW, drop channel padding.
    return jnp.transpose(out[..., :C], (0, 3, 1, 2))


def _reference(x_nchw, gamma, beta, running_mean, running_var, conv_weight):
    """Pure-JAX reference (mirrors the PyTorch forward, BN in eval mode)."""
    C = x_nchw.shape[1]
    g = gamma[None, :, None, None]
    b = beta[None, :, None, None]
    m = running_mean[None, :, None, None]
    v = running_var[None, :, None, None]
    y = (x_nchw - m) * lax.rsqrt(v + BN_EPS) * g + b
    y = jax.nn.gelu(y, approximate=False)
    return lax.conv_general_dilated(
        y, conv_weight,
        window_strides=(1, 1),
        padding=((1, 1), (1, 1)),
        dimension_numbers=("NCHW", "OIHW", "NCHW"),
        feature_group_count=C)


if __name__ == "__main__":
    B, C, H, W = 2, 4, 16, 16

    key = jax.random.PRNGKey(0)
    kx, kg, kb, km, kv, kw = jax.random.split(key, 6)

    x = jax.random.normal(kx, (B, C, H, W), jnp.float32)

    # Shapes match nn.BatchNorm2d(C) and nn.Conv2d(C, C, 3, groups=C, bias=False).
    gamma = 1.0 + 0.1 * jax.random.normal(kg, (C,), jnp.float32)
    beta = 0.1 * jax.random.normal(kb, (C,), jnp.float32)
    running_mean = 0.1 * jax.random.normal(km, (C,), jnp.float32)
    running_var = 1.0 + 0.1 * jax.random.uniform(kv, (C,), jnp.float32)
    conv_weight = 0.2 * jax.random.normal(kw, (C, 1, 3, 3), jnp.float32)

    fwd = jax.jit(depthwise_conv_forward)
    out = fwd(x, gamma, beta, running_mean, running_var, conv_weight)
    out = jax.block_until_ready(out)

    ref = _reference(x, gamma, beta, running_mean, running_var, conv_weight)
    ref = jax.block_until_ready(ref)

    assert out.shape == (B, C, H, W)
    assert jnp.allclose(out, ref, atol=1e-4, rtol=1e-4), (
        float(jnp.max(jnp.abs(out - ref))))

    print("KERNEL_OK")
</pallas_src>

<mosaic_0001>
module attributes {stable_mosaic.version = 11 : i64} {
  func.func @_dwconv_kernel(%arg0: i32, %arg1: i32, %arg2: memref<1x16x16x128xf32, #tpu.memory_space<vmem>>, %arg3: memref<1x1x128xf32, #tpu.memory_space<vmem>>, %arg4: memref<1x1x128xf32, #tpu.memory_space<vmem>>, %arg5: memref<3x3x128xf32, #tpu.memory_space<vmem>>, %arg6: memref<1x16x16x128xf32, #tpu.memory_space<vmem>>) attributes {dimension_semantics = [#tpu.dimension_semantics<parallel>, #tpu.dimension_semantics<parallel>], iteration_bounds = array<i64: 1, 2>, scalar_prefetch = 0 : i64, scratch_operands = 0 : i64, tpu.core_type = #tpu.core_type<tc>, window_params = [{transform_indices = @transform_0, window_bounds = array<i64: 1, 16, 16, 128>}, {transform_indices = @transform_1, window_bounds = array<i64: 1, 1, 128>}, {transform_indices = @transform_2, window_bounds = array<i64: 1, 1, 128>}, {transform_indices = @transform_3, window_bounds = array<i64: 3, 3, 128>}, {transform_indices = @transform_4, window_bounds = array<i64: 1, 16, 16, 128>}]} {
    %c0 = arith.constant 0 : index
    %c0_0 = arith.constant 0 : index
    %c0_1 = arith.constant 0 : index
    %c0_2 = arith.constant 0 : index
    %0 = vector.load %arg2[%c0, %c0_0, %c0_1, %c0_2] : memref<1x16x16x128xf32, #tpu.memory_space<vmem>>, vector<1x16x16x128xf32>
    %1 = vector.shape_cast %0 : vector<1x16x16x128xf32> to vector<16x16x128xf32>
    %c0_3 = arith.constant 0 : index
    %c0_4 = arith.constant 0 : index
    %c0_5 = arith.constant 0 : index
    %2 = vector.load %arg3[%c0_3, %c0_4, %c0_5] : memref<1x1x128xf32, #tpu.memory_space<vmem>>, vector<1x1x128xf32>
    %3 = vector.broadcast %2 : vector<1x1x128xf32> to vector<16x16x128xf32>
    %4 = arith.mulf %1, %3 : vector<16x16x128xf32>
    %c0_6 = arith.constant 0 : index
    %c0_7 = arith.constant 0 : index
    %c0_8 = arith.constant 0 : index
    %5 = vector.load %arg4[%c0_6, %c0_7, %c0_8] : memref<1x1x128xf32, #tpu.memory_space<vmem>>, vector<1x1x128xf32>
    %6 = vector.broadcast %5 : vector<1x1x128xf32> to vector<16x16x128xf32>
    %7 = arith.addf %4, %6 : vector<16x16x128xf32>
    %cst = arith.constant 5.000000e-01 : f32
    %8 = vector.broadcast %cst : f32 to vector<16x16x128xf32>
    %9 = arith.mulf %8, %7 : vector<16x16x128xf32>
    %cst_9 = arith.constant 0.707106769 : f32
    %10 = vector.broadcast %cst_9 : f32 to vector<16x16x128xf32>
    %11 = arith.mulf %7, %10 : vector<16x16x128xf32>
    %12 = math.erf %11 : vector<16x16x128xf32>
    %cst_10 = arith.constant 1.000000e+00 : f32
    %13 = vector.broadcast %cst_10 : f32 to vector<16x16x128xf32>
    %14 = arith.addf %13, %12 : vector<16x16x128xf32>
    %15 = arith.mulf %9, %14 : vector<16x16x128xf32>
    %c0_11 = arith.constant 0 : index
    %c0_12 = arith.constant 0 : index
    %c0_13 = arith.constant 0 : index
    %16 = vector.load %arg5[%c0_11, %c0_12, %c0_13] : memref<3x3x128xf32, #tpu.memory_space<vmem>>, vector<3x3x128xf32>
    %17 = tpu.iota {dimensions = array<i32: 1>} : vector<1x16x1xi32>
    %c0_i32 = arith.constant 0 : i32
    %18 = vector.broadcast %c0_i32 : i32 to vector<1x16x1xi32>
    %19 = arith.cmpi eq, %17, %18 : vector<1x16x1xi32>
    %c1_i32 = arith.constant 1 : i32
    %20 = tpu.dynamic_rotate %15 by %c1_i32 dim 1 : vector<16x16x128xf32>, i32 -> vector<16x16x128xf32>
    %cst_14 = arith.constant 0.000000e+00 : f32
    %21 = vector.shape_cast %19 : vector<1x16x1xi1> to vector<1x16x1xi1>
    %22 = vector.broadcast %21 : vector<1x16x1xi1> to vector<16x16x128xi1>
    %23 = vector.broadcast %cst_14 : f32 to vector<16x16x128xf32>
    %24 = arith.select %22, %23, %20 : vector<16x16x128xi1>, vector<16x16x128xf32>
    %c15_i32 = arith.constant 15 : i32
    %25 = vector.broadcast %c15_i32 : i32 to vector<1x16x1xi32>
    %26 = arith.cmpi eq, %17, %25 : vector<1x16x1xi32>
    %c15_i32_15 = arith.constant 15 : i32
    %27 = tpu.dynamic_rotate %15 by %c15_i32_15 dim 1 : vector<16x16x128xf32>, i32 -> vector<16x16x128xf32>
    %cst_16 = arith.constant 0.000000e+00 : f32
    %28 = vector.shape_cast %26 : vector<1x16x1xi1> to vector<1x16x1xi1>
    %29 = vector.broadcast %28 : vector<1x16x1xi1> to vector<16x16x128xi1>
    %30 = vector.broadcast %cst_16 : f32 to vector<16x16x128xf32>
    %31 = arith.select %29, %30, %27 : vector<16x16x128xi1>, vector<16x16x128xf32>
    %32 = vector.extract_strided_slice %16 {offsets = [0, 0, 0], sizes = [1, 1, 128], strides = [1, 1, 1]} : vector<3x3x128xf32> to vector<1x1x128xf32>
    %33 = vector.shape_cast %32 : vector<1x1x128xf32> to vector<128xf32>
    %34 = vector.shape_cast %33 : vector<128xf32> to vector<1x1x128xf32>
    %35 = vector.broadcast %34 : vector<1x1x128xf32> to vector<16x16x128xf32>
    %36 = arith.mulf %24, %35 : vector<16x16x128xf32>
    %37 = vector.extract_strided_slice %16 {offsets = [0, 1, 0], sizes = [1, 1, 128], strides = [1, 1, 1]} : vector<3x3x128xf32> to vector<1x1x128xf32>
    %38 = vector.shape_cast %37 : vector<1x1x128xf32> to vector<128xf32>
    %39 = vector.shape_cast %38 : vector<128xf32> to vector<1x1x128xf32>
    %40 = vector.broadcast %39 : vector<1x1x128xf32> to vector<16x16x128xf32>
    %41 = arith.mulf %15, %40 : vector<16x16x128xf32>
    %42 = arith.addf %36, %41 : vector<16x16x128xf32>
    %43 = vector.extract_strided_slice %16 {offsets = [0, 2, 0], sizes = [1, 1, 128], strides = [1, 1, 1]} : vector<3x3x128xf32> to vector<1x1x128xf32>
    %44 = vector.shape_cast %43 : vector<1x1x128xf32> to vector<128xf32>
    %45 = vector.shape_cast %44 : vector<128xf32> to vector<1x1x128xf32>
    %46 = vector.broadcast %45 : vector<1x1x128xf32> to vector<16x16x128xf32>
    %47 = arith.mulf %31, %46 : vector<16x16x128xf32>
    %48 = arith.addf %42, %47 : vector<16x16x128xf32>
    %49 = vector.extract_strided_slice %16 {offsets = [1, 0, 0], sizes = [1, 1, 128], strides = [1, 1, 1]} : vector<3x3x128xf32> to vector<1x1x128xf32>
    %50 = vector.shape_cast %49 : vector<1x1x128xf32> to vector<128xf32>
    %51 = vector.shape_cast %50 : vector<128xf32> to vector<1x1x128xf32>
    %52 = vector.broadcast %51 : vector<1x1x128xf32> to vector<16x16x128xf32>
    %53 = arith.mulf %24, %52 : vector<16x16x128xf32>
    %54 = vector.extract_strided_slice %16 {offsets = [1, 1, 0], sizes = [1, 1, 128], strides = [1, 1, 1]} : vector<3x3x128xf32> to vector<1x1x128xf32>
    %55 = vector.shape_cast %54 : vector<1x1x128xf32> to vector<128xf32>
    %56 = vector.shape_cast %55 : vector<128xf32> to vector<1x1x128xf32>
    %57 = vector.broadcast %56 : vector<1x1x128xf32> to vector<16x16x128xf32>
    %58 = arith.mulf %15, %57 : vector<16x16x128xf32>
    %59 = arith.addf %53, %58 : vector<16x16x128xf32>
    %60 = vector.extract_strided_slice %16 {offsets = [1, 2, 0], sizes = [1, 1, 128], strides = [1, 1, 1]} : vector<3x3x128xf32> to vector<1x1x128xf32>
    %61 = vector.shape_cast %60 : vector<1x1x128xf32> to vector<128xf32>
    %62 = vector.shape_cast %61 : vector<128xf32> to vector<1x1x128xf32>
    %63 = vector.broadcast %62 : vector<1x1x128xf32> to vector<16x16x128xf32>
    %64 = arith.mulf %31, %63 : vector<16x16x128xf32>
    %65 = arith.addf %59, %64 : vector<16x16x128xf32>
    %66 = vector.extract_strided_slice %16 {offsets = [2, 0, 0], sizes = [1, 1, 128], strides = [1, 1, 1]} : vector<3x3x128xf32> to vector<1x1x128xf32>
    %67 = vector.shape_cast %66 : vector<1x1x128xf32> to vector<128xf32>
    %68 = vector.shape_cast %67 : vector<128xf32> to vector<1x1x128xf32>
    %69 = vector.broadcast %68 : vector<1x1x128xf32> to vector<16x16x128xf32>
    %70 = arith.mulf %24, %69 : vector<16x16x128xf32>
    %71 = vector.extract_strided_slice %16 {offsets = [2, 1, 0], sizes = [1, 1, 128], strides = [1, 1, 1]} : vector<3x3x128xf32> to vector<1x1x128xf32>
    %72 = vector.shape_cast %71 : vector<1x1x128xf32> to vector<128xf32>
    %73 = vector.shape_cast %72 : vector<128xf32> to vector<1x1x128xf32>
    %74 = vector.broadcast %73 : vector<1x1x128xf32> to vector<16x16x128xf32>
    %75 = arith.mulf %15, %74 : vector<16x16x128xf32>
    %76 = arith.addf %70, %75 : vector<16x16x128xf32>
    %77 = vector.extract_strided_slice %16 {offsets = [2, 2, 0], sizes = [1, 1, 128], strides = [1, 1, 1]} : vector<3x3x128xf32> to vector<1x1x128xf32>
    %78 = vector.shape_cast %77 : vector<1x1x128xf32> to vector<128xf32>
    %79 = vector.shape_cast %78 : vector<128xf32> to vector<1x1x128xf32>
    %80 = vector.broadcast %79 : vector<1x1x128xf32> to vector<16x16x128xf32>
    %81 = arith.mulf %31, %80 : vector<16x16x128xf32>
    %82 = arith.addf %76, %81 : vector<16x16x128xf32>
    %cst_17 = arith.constant 0.000000e+00 : f32
    %83 = vector.broadcast %cst_17 : f32 to vector<1x16x128xf32>
    %84 = vector.extract_strided_slice %48 {offsets = [0, 0, 0], sizes = [15, 16, 128], strides = [1, 1, 1]} : vector<16x16x128xf32> to vector<15x16x128xf32>
    %85 = tpu.concatenate %83, %84 in 0 : vector<1x16x128xf32>, vector<15x16x128xf32> -> vector<16x16x128xf32>
    %86 = arith.addf %65, %85 : vector<16x16x128xf32>
    %87 = vector.extract_strided_slice %82 {offsets = [1, 0, 0], sizes = [15, 16, 128], strides = [1, 1, 1]} : vector<16x16x128xf32> to vector<15x16x128xf32>
    %88 = tpu.concatenate %87, %83 in 0 : vector<15x16x128xf32>, vector<1x16x128xf32> -> vector<16x16x128xf32>
    %89 = arith.addf %86, %88 : vector<16x16x128xf32>
    %c0_18 = arith.constant 0 : index
    %c0_19 = arith.constant 0 : index
    %c0_20 = arith.constant 0 : index
    %c0_21 = arith.constant 0 : index
    %90 = vector.load %arg6[%c0_18, %c0_19, %c0_20, %c0_21] : memref<1x16x16x128xf32, #tpu.memory_space<vmem>>, vector<1x16x16x128xf32>
    %91 = vector.shape_cast %90 : vector<1x16x16x128xf32> to vector<16x16x128xf32>
    %92 = vector.shape_cast %89 : vector<16x16x128xf32> to vector<1x16x16x128xf32>
    tpu.vector_store %arg6[%c0_18, %c0_19, %c0_20, %c0_21], %92 {strides = array<i32>} : memref<1x16x16x128xf32, #tpu.memory_space<vmem>>, vector<1x16x16x128xf32>,
    return
  }
  func.func @transform_0(%arg0: i32, %arg1: i32) -> (i32, i32, i32, i32) {
    %c0_i32 = arith.constant 0 : i32
    %c0_i32_0 = arith.constant 0 : i32
    %c0_i32_1 = arith.constant 0 : i32
    return %arg1, %c0_i32, %c0_i32_0, %arg0 : i32, i32, i32, i32
  }
  func.func @transform_1(%arg0: i32, %arg1: i32) -> (i32, i32, i32) {
    %c0_i32 = arith.constant 0 : i32
    %c0_i32_0 = arith.constant 0 : i32
    %c0_i32_1 = arith.constant 0 : i32
    return %c0_i32, %c0_i32_0, %arg0 : i32, i32, i32
  }
  func.func @transform_2(%arg0: i32, %arg1: i32) -> (i32, i32, i32) {
    %c0_i32 = arith.constant 0 : i32
    %c0_i32_0 = arith.constant 0 : i32
    %c0_i32_1 = arith.constant 0 : i32
    return %c0_i32, %c0_i32_0, %arg0 : i32, i32, i32
  }
  func.func @transform_3(%arg0: i32, %arg1: i32) -> (i32, i32, i32) {
    %c0_i32 = arith.constant 0 : i32
    %c0_i32_0 = arith.constant 0 : i32
    %c0_i32_1 = arith.constant 0 : i32
    return %c0_i32, %c0_i32_0, %arg0 : i32, i32, i32
  }
  func.func @transform_4(%arg0: i32, %arg1: i32) -> (i32, i32, i32, i32) {
    %c0_i32 = arith.constant 0 : i32
    %c0_i32_0 = arith.constant 0 : i32
    %c0_i32_1 = arith.constant 0 : i32
    return %arg1, %c0_i32, %c0_i32_0, %arg0 : i32, i32, i32, i32
  }
}

</mosaic_0001>

<llo_original>
// kernel: depthwise_conv_forward.1
$region0: #{depthwise_conv_forward.1}
  #allocation0 [shape = 'u32[]', space=smem, size = 0x4, offset = 0x4, fixed_abs, tag = 'smem constant byte address 0x4 - core index']
  #allocation1 [shape = 'u32[144,128]{1,0:T(1,128)}', space=vmem, size = 0x12000, scoped, tag = 'internal scratch']
  %s0 = inlined_call_operand.vmem [shape: f32[2,16,16,128], index: 0, kind: input, shape index: {}]
  %s1 = inlined_call_operand.vmem [shape: f32[1,1,128], index: 1, kind: input, shape index: {}]
  %s2 = inlined_call_operand.vmem [shape: f32[1,1,128], index: 2, kind: input, shape index: {}]
  %s3 = inlined_call_operand.vmem [shape: f32[3,3,128], index: 3, kind: input, shape index: {}]
  %s4 = inlined_call_operand.vmem [shape: f32[2,16,16,128], index: 4, kind: output, shape index: {}]
  %s5 = sld [smem:[#allocation0]]
  $region49: #{depthwise_conv_forward.1} parent=0
    _
  %s7 = ssub.s32 1, %s5
  %s8 = scalar_select 0, %s7, %s5
  loop: start=0, step=1, limit=4
  $region2: #{depthwise_conv_forward.1} parent=0 // loop_pre_header
    _
  $region3: #{depthwise_conv_forward.1} parent=0 // loop_header
    %s10 = sphi 0, %s14
    %p11 = scmp.ge.s32.totalorder %s10, 4
    %s17 = sphi 0, %s29
    %s18 = sphi 0, %s25
    %s19 = sphi 0, %s17
    %s20 = sphi 0, %s18
    %s21 = sphi 0, %s19
    %s22 = sphi 0, %s20
    %s34 = sphi 0, %s36
    %s37 = sphi 0, %s34
    %s38 = sphi 0, %s37
    %s54 = sphi 0, %s38
    %s60 = sphi 0, %s62
    %s63 = sphi 0, %s60
    %s64 = sphi 0, %s63
    %s80 = sphi 0, %s64
    %s86 = sphi 0, %s88
    %s89 = sphi 0, %s86
    %s90 = sphi 0, %s89
    %s106 = sphi 0, %s90
    %s112 = sphi 0, %s114
    %s115 = sphi 0, %s112
    %s116 = sphi 0, %s115
    %s132 = sphi 0, %s116
    %s140 = sphi 0, %s142
    %s143 = sphi 0, %s140
    %s144 = sphi 0, %s143
    %s160 = sphi 0, %s144
  $region4: #{depthwise_conv_forward.1} parent=0 // loop_header_branch
    %13 = sbr.rel (%p11) target = $region8
  $region5: #{depthwise_conv_forward.1} parent=0 // loop_body
    %s15 = ssub.s32 %s10, 1
    %s16 = ssub.s32 %s10, 2
    %s23 = sadd.s32 1, %s18
    %p24 = scmp.ge.s32.totalorder %s23, 2
    %s25 = scalar_select %p24, 0, %s23
    %s26 = sadd.s32 1, %s17
    %s27 = scalar_select %p24, %s26, %s17
    %p28 = scmp.ge.s32.totalorder %s27, 1
    %s29 = scalar_select %p28, 0, %s27
    %s30 = ssub.s32 %s18, %s25
    %s31 = ssub.s32 %s17, %s29
    %s32 = sor.u32 %s30, %s31
    %p33 = scmp.eq.s32.totalorder %s32, 0
    %s35 = sadd.s32 %s34, 1
    %s36 = scalar_select %p33, %s34, %s35
    %p39 = pneg %p33
    %p40 = scmp.eq.s32.totalorder %s10, 1
    %p41 = por %p39, %p40
    %p42 = scmp.ne.s32.totalorder %s34, %s37
    %p43 = scmp.eq.s32.totalorder %s10, 0
    %p44 = por %p42, %p43
    %p45 = scmp.ne.s32.totalorder %s34, %s37
    %p46 = scmp.eq.s32.totalorder %s15, 1
    %p47 = por %p45, %p46
    %p48 = scmp.ne.s32.totalorder %s37, %s38
    %p49 = scmp.eq.s32.totalorder %s15, 0
    %p50 = por %p48, %p49
    %p51 = scmp.ne.s32.totalorder %s37, %s38
    %p52 = scmp.eq.s32.totalorder %s16, 1
    %p53 = por %p51, %p52
    %p55 = scmp.ne.s32.totalorder %s38, %s54
    %p56 = scmp.eq.s32.totalorder %s16, 0
    %p57 = por %p55, %p56
    %s58 = ssub.s32 %s17, %s29
    %p59 = scmp.eq.s32.totalorder %s58, 0
    %s61 = sadd.s32 %s60, 1
    %s62 = scalar_select %p59, %s60, %s61
    %p65 = pneg %p59
    %p66 = scmp.eq.s32.totalorder %s10, 1
    %p67 = por %p65, %p66
    %p68 = scmp.ne.s32.totalorder %s60, %s63
    %p69 = scmp.eq.s32.totalorder %s10, 0
    %p70 = por %p68, %p69
    %p71 = scmp.ne.s32.totalorder %s60, %s63
    %p72 = scmp.eq.s32.totalorder %s15, 1
    %p73 = por %p71, %p72
    %p74 = scmp.ne.s32.totalorder %s63, %s64
    %p75 = scmp.eq.s32.totalorder %s15, 0
    %p76 = por %p74, %p75
    %p77 = scmp.ne.s32.totalorder %s63, %s64
    %p78 = scmp.eq.s32.totalorder %s16, 1
    %p79 = por %p77, %p78
    %p81 = scmp.ne.s32.totalorder %s64, %s80
    %p82 = scmp.eq.s32.totalorder %s16, 0
    %p83 = por %p81, %p82
    %s84 = ssub.s32 %s17, %s29
    %p85 = scmp.eq.s32.totalorder %s84, 0
    %s87 = sadd.s32 %s86, 1
    %s88 = scalar_select %p85, %s86, %s87
    %p91 = pneg %p85
    %p92 = scmp.eq.s32.totalorder %s10, 1
    %p93 = por %p91, %p92
    %p94 = scmp.ne.s32.totalorder %s86, %s89
    %p95 = scmp.eq.s32.totalorder %s10, 0
    %p96 = por %p94, %p95
    %p97 = scmp.ne.s32.totalorder %s86, %s89
    %p98 = scmp.eq.s32.totalorder %s15, 1
    %p99 = por %p97, %p98
    %p100 = scmp.ne.s32.totalorder %s89, %s90
    %p101 = scmp.eq.s32.totalorder %s15, 0
    %p102 = por %p100, %p101
    %p103 = scmp.ne.s32.totalorder %s89, %s90
    %p104 = scmp.eq.s32.totalorder %s16, 1
    %p105 = por %p103, %p104
    %p107 = scmp.ne.s32.totalorder %s90, %s106
    %p108 = scmp.eq.s32.totalorder %s16, 0
    %p109 = por %p107, %p108
    %s110 = ssub.s32 %s17, %s29
    %p111 = scmp.eq.s32.totalorder %s110, 0
    %s113 = sadd.s32 %s112, 1
    %s114 = scalar_select %p111, %s112, %s113
    %p117 = pneg %p111
    %p118 = scmp.eq.s32.totalorder %s10, 1
    %p119 = por %p117, %p118
    %p120 = scmp.ne.s32.totalorder %s112, %s115
    %p121 = scmp.eq.s32.totalorder %s10, 0
    %p122 = por %p120, %p121
    %p123 = scmp.ne.s32.totalorder %s112, %s115
    %p124 = scmp.eq.s32.totalorder %s15, 1
    %p125 = por %p123, %p124
    %p126 = scmp.ne.s32.totalorder %s115, %s116
    %p127 = scmp.eq.s32.totalorder %s15, 0
    %p128 = por %p126, %p127
    %p129 = scmp.ne.s32.totalorder %s115, %s116
    %p130 = scmp.eq.s32.totalorder %s16, 1
    %p131 = por %p129, %p130
    %p133 = scmp.ne.s32.totalorder %s116, %s132
    %p134 = scmp.eq.s32.totalorder %s16, 0
    %p135 = por %p133, %p134
    %s136 = ssub.s32 %s18, %s25
    %s137 = ssub.s32 %s17, %s29
    %s138 = sor.u32 %s136, %s137
    %p139 = scmp.eq.s32.totalorder %s138, 0
    %s141 = sadd.s32 %s140, 1
    %s142 = scalar_select %p139, %s140, %s141
    %p145 = pneg %p139
    %p146 = scmp.eq.s32.totalorder %s10, 1
    %p147 = por %p145, %p146
    %p148 = scmp.ne.s32.totalorder %s140, %s143
    %p149 = scmp.eq.s32.totalorder %s10, 0
    %p150 = por %p148, %p149
    %p151 = scmp.ne.s32.totalorder %s140, %s143
    %p152 = scmp.eq.s32.totalorder %s15, 1
    %p153 = por %p151, %p152
    %p154 = scmp.ne.s32.totalorder %s143, %s144
    %p155 = scmp.eq.s32.totalorder %s15, 0
    %p156 = por %p154, %p155
    %p157 = scmp.ne.s32.totalorder %s143, %s144
    %p158 = scmp.eq.s32.totalorder %s16, 1
    %p159 = por %p157, %p158
    %p161 = scmp.ne.s32.totalorder %s144, %s160
    %p162 = scmp.eq.s32.totalorder %s16, 0
    %p163 = por %p161, %p162
    %p164 = scmp.le.s32.totalorder 1, %s10
    %p165 = scmp.lt.s32.totalorder %s10, 3
    %p166 = pnand %p164, %p165
    %p167 = pneg %p166
    // Predicated region
    $region9: #{depthwise_conv_forward.1} parent=5 // pred_check
      _
    $region10: #{depthwise_conv_forward.1} parent=5 // pred_check_branch
      %169 = sbr.rel (%p166) target = $region12
    $region11: #{depthwise_conv_forward.1} parent=5 // pred_region
      %s170 = ssub.s32 %s10, 1
      // Predicated region
      $region13: #{depthwise_conv_forward.1} parent=11 // pred_check
        %p171 = pneg %p76
      $region14: #{depthwise_conv_forward.1} parent=11 // pred_check_branch
        %173 = sbr.rel (%p171) target = $region16
      $region15: #{depthwise_conv_forward.1} parent=11 // pred_region
        %p174 = scmp.lt.s32.totalorder %s19, 0
        %s175 = scalar_select %p174, %s19, 0
        %s176 = scalar_lea.vmem %s1, %s175
      $region16: #{depthwise_conv_forward.1} parent=11 // pred_fallthru
        _
      // Predicated region
      $region17: #{depthwise_conv_forward.1} parent=11 // pred_check
        %p177 = pneg %p102
      $region18: #{depthwise_conv_forward.1} parent=11 // pred_check_branch
        %179 = sbr.rel (%p177) target = $region20
      $region19: #{depthwise_conv_forward.1} parent=11 // pred_region
        %p180 = scmp.lt.s32.totalorder %s19, 0
        %s181 = scalar_select %p180, %s19, 0
        %s182 = scalar_lea.vmem %s2, %s181
      $region20: #{depthwise_conv_forward.1} parent=11 // pred_fallthru
        _
      // Predicated region
      $region21: #{depthwise_conv_forward.1} parent=11 // pred_check
        %p183 = pneg %p128
      $region22: #{depthwise_conv_forward.1} parent=11 // pred_check_branch
        %185 = sbr.rel (%p183) target = $region24
      $region23: #{depthwise_conv_forward.1} parent=11 // pred_region
        %p186 = scmp.lt.s32.totalorder %s19, 0
        %s187 = scalar_select %p186, %s19, 0
        %s188 = smul.addr %s187, 4
        %s189 = scalar_lea.vmem %s3, %s188
      $region24: #{depthwise_conv_forward.1} parent=11 // pred_fallthru
        _
    $region12: #{depthwise_conv_forward.1} parent=5 // pred_fallthru
      _
    %p190 = scmp.lt.s32.totalorder %s10, 2
    // Predicated region
    $region25: #{depthwise_conv_forward.1} parent=5 // pred_check
      %p191 = pneg %p190
    $region26: #{depthwise_conv_forward.1} parent=5 // pred_check_branch
      %193 = sbr.rel (%p191) target = $region28
    $region27: #{depthwise_conv_forward.1} parent=5 // pred_region
      // Predicated region
      $region29: #{depthwise_conv_forward.1} parent=27 // pred_check
        %p194 = pneg %p44
      $region30: #{depthwise_conv_forward.1} parent=27 // pred_check_branch
        %196 = sbr.rel (%p194) target = $region32
      $region31: #{depthwise_conv_forward.1} parent=27 // pred_region
        %p197 = scmp.lt.s32.totalorder %s18, 1
        %s198 = scalar_select %p197, %s18, 1
        %p199 = scmp.lt.s32.totalorder %s17, 0
        %s200 = scalar_select %p199, %s17, 0
        %s201 = smul.addr %s198, 32
        %s202 = sadd.s32 %s200, %s201
        %s203 = smul.addr %s202, 8
        %s204 = scalar_lea.vmem %s0, %s203
      $region32: #{depthwise_conv_forward.1} parent=27 // pred_fallthru
        _
    $region28: #{depthwise_conv_forward.1} parent=5 // pred_fallthru
      _
    %p205 = scmp.le.s32.totalorder 1, %s10
    %p206 = scmp.lt.s32.totalorder %s10, 3
    %p207 = pnand %p205, %p206
    %p208 = pneg %p207
    // Predicated region
    $region33: #{depthwise_conv_forward.1} parent=5 // pred_check
      _
    $region34: #{depthwise_conv_forward.1} parent=5 // pred_check_branch
      %210 = sbr.rel (%p207) target = $region36
    $region35: #{depthwise_conv_forward.1} parent=5 // pred_region
      %s211 = ssub.s32 %s10, 1
      %p212 = scmp.lt.s32.totalorder %s20, 1
      %s213 = scalar_select %p212, %s20, 1
      %p214 = scmp.lt.s32.totalorder %s19, 0
      %s215 = scalar_select %p214, %s19, 0
      %s216 = smul.addr %s213, 32
      %s217 = sadd.s32 %s215, %s216
      %s218 = smul.addr %s217, 8
      %s219 = scalar_lea.vmem %s0, %s218
      %p220 = pneg %p50
      %p221 = pneg %p47
      %p222 = scmp.lt.s32.totalorder %s19, 0
      %s223 = scalar_select %p222, %s19, 0
      %s224 = scalar_lea.vmem %s1, %s223
      %p225 = pneg %p76
      %p226 = pneg %p73
      %p227 = scmp.lt.s32.totalorder %s19, 0
      %s228 = scalar_select %p227, %s19, 0
      %s229 = scalar_lea.vmem %s2, %s228
      %p230 = pneg %p102
      %p231 = pneg %p99
      %p232 = scmp.lt.s32.totalorder %s19, 0
      %s233 = scalar_select %p232, %s19, 0
      %s234 = smul.addr %s233, 4
      %s235 = scalar_lea.vmem %s3, %s234
      %p236 = pneg %p128
      %p237 = pneg %p125
      %p238 = pneg %p156
      %p239 = pneg %p153
      %p240 = scmp.lt.s32.totalorder %s20, 1
      %s241 = scalar_select %p240, %s20, 1
      %p242 = scmp.lt.s32.totalorder %s19, 0
      %s243 = scalar_select %p242, %s19, 0
      %s244 = smul.addr %s241, 32
      %s245 = sadd.s32 %s243, %s244
      %s246 = smul.addr %s245, 8
      %s247 = scalar_lea.vmem %s4, %s246
      %p248 = scmp.lt.s32.totalorder %s20, 1
      %s249 = scalar_select %p248, %s20, 1
      %p250 = scmp.lt.s32.totalorder %s19, 0
      %s251 = scalar_select %p250, %s19, 0
      %s252 = smul.addr %s249, 32
      %s253 = sadd.s32 %s251, %s252
      %s254 = smul.addr %s253, 8
      %s255 = scalar_lea.vmem %s0, %s254
      %p256 = scmp.lt.s32.totalorder %s19, 0
      %s257 = scalar_select %p256, %s19, 0
      %s258 = scalar_lea.vmem %s1, %s257
      %p259 = scmp.lt.s32.totalorder %s19, 0
      %s260 = scalar_select %p259, %s19, 0
      %s261 = scalar_lea.vmem %s2, %s260
      %p262 = scmp.lt.s32.totalorder %s19, 0
      %s263 = scalar_select %p262, %s19, 0
      %s264 = smul.addr %s263, 4
      %s265 = scalar_lea.vmem %s3, %s264
      %p266 = scmp.lt.s32.totalorder %s20, 1
      %s267 = scalar_select %p266, %s20, 1
      %p268 = scmp.lt.s32.totalorder %s19, 0
      %s269 = scalar_select %p268, %s19, 0
      %s270 = smul.addr %s267, 32
      %s271 = sadd.s32 %s269, %s270
      %s272 = smul.addr %s271, 8
      %s273 = scalar_lea.vmem %s4, %s272
      %v274 = vld [vmem:[%s255] sm:$0xff]
      %v275 = vld [vmem:[%s255 + $0x8] sm:$0xff]
      %v276 = vld [vmem:[%s255 + $0x10] sm:$0xff]
      %v277 = vld [vmem:[%s255 + $0x18] sm:$0xff]
      %v278 = vld [vmem:[%s255 + $0x20] sm:$0xff]
      %v279 = vld [vmem:[%s255 + $0x28] sm:$0xff]
      %v280 = vld [vmem:[%s255 + $0x30] sm:$0xff]
      %v281 = vld [vmem:[%s255 + $0x38] sm:$0xff]
      %v282 = vld [vmem:[%s255 + $0x40] sm:$0xff]
      %v283 = vld [vmem:[%s255 + $0x48] sm:$0xff]
      %v284 = vld [vmem:[%s255 + $0x50] sm:$0xff]
      %v285 = vld [vmem:[%s255 + $0x58] sm:$0xff]
      %v286 = vld [vmem:[%s255 + $0x60] sm:$0xff]
      %v287 = vld [vmem:[%s255 + $0x68] sm:$0xff]
      %v288 = vld [vmem:[%s255 + $0x70] sm:$0xff]
      %v289 = vld [vmem:[%s255 + $0x78] sm:$0xff]
      %v290 = vld [vmem:[%s255 + $0x80] sm:$0xff]
      %v291 = vld [vmem:[%s255 + $0x88] sm:$0xff]
      %v292 = vld [vmem:[%s255 + $0x90] sm:$0xff]
      %v293 = vld [vmem:[%s255 + $0x98] sm:$0xff]
      %v294 = vld [vmem:[%s255 + $0xa0] sm:$0xff]
      %v295 = vld [vmem:[%s255 + $0xa8] sm:$0xff]
      %v296 = vld [vmem:[%s255 + $0xb0] sm:$0xff]
      %v297 = vld [vmem:[%s255 + $0xb8] sm:$0xff]
      %v298 = vld [vmem:[%s255 + $0xc0] sm:$0xff]
      %v299 = vld [vmem:[%s255 + $0xc8] sm:$0xff]
      %v300 = vld [vmem:[%s255 + $0xd0] sm:$0xff]
      %v301 = vld [vmem:[%s255 + $0xd8] sm:$0xff]
      %v302 = vld [vmem:[%s255 + $0xe0] sm:$0xff]
      %v303 = vld [vmem:[%s255 + $0xe8] sm:$0xff]
      %v304 = vld [vmem:[%s255 + $0xf0] sm:$0xff]
      %v305 = vld [vmem:[%s255 + $0xf8] sm:$0xff]
      %v306 = vld [vmem:[%s258] sm:$0x1]
      %v308 = vlaneseq
      %v309 = vshrl.u32 %v308, 7
      %v310 = vsub.s32 0, %v309
      %v311 = vrot.slane %v306, %v310
      %v313 = vmul.f32 %v274, %v311
      %v314 = vmul.f32 %v275, %v311
      %v315 = vmul.f32 %v276, %v311
      %v316 = vmul.f32 %v277, %v311
      %v317 = vmul.f32 %v278, %v311
      %v318 = vmul.f32 %v279, %v311
      %v319 = vmul.f32 %v280, %v311
      %v320 = vmul.f32 %v281, %v311
      %v321 = vmul.f32 %v282, %v311
      %v322 = vmul.f32 %v283, %v311
      %v323 = vmul.f32 %v284, %v311
      %v324 = vmul.f32 %v285, %v311
      %v325 = vmul.f32 %v286, %v311
      %v326 = vmul.f32 %v287, %v311
      %v327 = vmul.f32 %v288, %v311
      %v328 = vmul.f32 %v289, %v311
      %v329 = vmul.f32 %v290, %v311
      %v330 = vmul.f32 %v291, %v311
      %v331 = vmul.f32 %v292, %v311
      %v332 = vmul.f32 %v293, %v311
      %v333 = vmul.f32 %v294, %v311
      %v334 = vmul.f32 %v295, %v311
      %v335 = vmul.f32 %v296, %v311
      %v336 = vmul.f32 %v297, %v311
      %v337 = vmul.f32 %v298, %v311
      %v338 = vmul.f32 %v299, %v311
      %v339 = vmul.f32 %v300, %v311
      %v340 = vmul.f32 %v301, %v311
      %v341 = vmul.f32 %v302, %v311
      %v342 = vmul.f32 %v303, %v311
      %v343 = vmul.f32 %v304, %v311
      %v344 = vmul.f32 %v305, %v311
      %v345 = vld [vmem:[%s261] sm:$0x1]
      %v347 = vlaneseq
      %v348 = vshrl.u32 %v347, 7
      %v349 = vsub.s32 0, %v348
      %v350 = vrot.slane %v345, %v349
      %v352 = vadd.f32 %v313, %v350
      %v353 = vadd.f32 %v314, %v350
      %v354 = vadd.f32 %v315, %v350
      %v355 = vadd.f32 %v316, %v350
      %v356 = vadd.f32 %v317, %v350
      %v357 = vadd.f32 %v318, %v350
      %v358 = vadd.f32 %v319, %v350
      %v359 = vadd.f32 %v320, %v350
      %v360 = vadd.f32 %v321, %v350
      %v361 = vadd.f32 %v322, %v350
      %v362 = vadd.f32 %v323, %v350
      %v363 = vadd.f32 %v324, %v350
      %v364 = vadd.f32 %v325, %v350
      %v365 = vadd.f32 %v326, %v350
      %v366 = vadd.f32 %v327, %v350
      %v367 = vadd.f32 %v328, %v350
      %v368 = vadd.f32 %v329, %v350
      %v369 = vadd.f32 %v330, %v350
      %v370 = vadd.f32 %v331, %v350
      %v371 = vadd.f32 %v332, %v350
      %v372 = vadd.f32 %v333, %v350
      %v373 = vadd.f32 %v334, %v350
      %v374 = vadd.f32 %v335, %v350
      %v375 = vadd.f32 %v336, %v350
      %v376 = vadd.f32 %v337, %v350
      %v377 = vadd.f32 %v338, %v350
      %v378 = vadd.f32 %v339, %v350
      %v379 = vadd.f32 %v340, %v350
      %v380 = vadd.f32 %v341, %v350
      %v381 = vadd.f32 %v342, %v350
      %v382 = vadd.f32 %v343, %v350
      %v383 = vadd.f32 %v344, %v350
      %v384 = vmul.f32 %v352, 0.5
      %v385 = vmul.f32 %v353, 0.5
      %v386 = vmul.f32 %v354, 0.5
      %v387 = vmul.f32 %v355, 0.5
      %v388 = vmul.f32 %v356, 0.5
      %v389 = vmul.f32 %v357, 0.5
      %v390 = vmul.f32 %v358, 0.5
      %v391 = vmul.f32 %v359, 0.5
      %v392 = vmul.f32 %v360, 0.5
      %v393 = vmul.f32 %v361, 0.5
      %v394 = vmul.f32 %v362, 0.5
      %v395 = vmul.f32 %v363, 0.5
      %v396 = vmul.f32 %v364, 0.5
      %v397 = vmul.f32 %v365, 0.5
      %v398 = vmul.f32 %v366, 0.5
      %v399 = vmul.f32 %v367, 0.5
      %v400 = vmul.f32 %v368, 0.5
      %v401 = vmul.f32 %v369, 0.5
      %v402 = vmul.f32 %v370, 0.5
      %v403 = vmul.f32 %v371, 0.5
      %v404 = vmul.f32 %v372, 0.5
      %v405 = vmul.f32 %v373, 0.5
      %v406 = vmul.f32 %v374, 0.5
      %v407 = vmul.f32 %v375, 0.5
      %v408 = vmul.f32 %v376, 0.5
      %v409 = vmul.f32 %v377, 0.5
      %v410 = vmul.f32 %v378, 0.5
      %v411 = vmul.f32 %v379, 0.5
      %v412 = vmul.f32 %v380, 0.5
      %v413 = vmul.f32 %v381, 0.5
      %v414 = vmul.f32 %v382, 0.5
      %v415 = vmul.f32 %v383, 0.5
      %v416 = vmul.f32 %v352, 0.70710677
      %v417 = vmul.f32 %v353, 0.70710677
      %v418 = vmul.f32 %v354, 0.70710677
      %v419 = vmul.f32 %v355, 0.70710677
      %v420 = vmul.f32 %v356, 0.70710677
      %v421 = vmul.f32 %v357, 0.70710677
      %v422 = vmul.f32 %v358, 0.70710677
      %v423 = vmul.f32 %v359, 0.70710677
      %v424 = vmul.f32 %v360, 0.70710677
      %v425 = vmul.f32 %v361, 0.70710677
      %v426 = vmul.f32 %v362, 0.70710677
      %v427 = vmul.f32 %v363, 0.70710677
      %v428 = vmul.f32 %v364, 0.70710677
      %v429 = vmul.f32 %v365, 0.70710677
      %v430 = vmul.f32 %v366, 0.70710677
      %v431 = vmul.f32 %v367, 0.70710677
      %v432 = vmul.f32 %v368, 0.70710677
      %v433 = vmul.f32 %v369, 0.70710677
      %v434 = vmul.f32 %v370, 0.70710677
      %v435 = vmul.f32 %v371, 0.70710677
      %v436 = vmul.f32 %v372, 0.70710677
      %v437 = vmul.f32 %v373, 0.70710677
      %v438 = vmul.f32 %v374, 0.70710677
      %v439 = vmul.f32 %v375, 0.70710677
      %v440 = vmul.f32 %v376, 0.70710677
      %v441 = vmul.f32 %v377, 0.70710677
      %v442 = vmul.f32 %v378, 0.70710677
      %v443 = vmul.f32 %v379, 0.70710677
      %v444 = vmul.f32 %v380, 0.70710677
      %v445 = vmul.f32 %v381, 0.70710677
      %v446 = vmul.f32 %v382, 0.70710677
      %v447 = vmul.f32 %v383, 0.70710677
      %v448 = verf.f32.pop %v416
      %v449 = verf.f32.pop %v417
      %v450 = verf.f32.pop %v418
      %v451 = verf.f32.pop %v419
      %v452 = verf.f32.pop %v420
      %v453 = verf.f32.pop %v421
      %v454 = verf.f32.pop %v422
      %v455 = verf.f32.pop %v423
      %v456 = verf.f32.pop %v424
      %v457 = verf.f32.pop %v425
      %v458 = verf.f32.pop %v426
      %v459 = verf.f32.pop %v427
      %v460 = verf.f32.pop %v428
      %v461 = verf.f32.pop %v429
      %v462 = verf.f32.pop %v430
      %v463 = verf.f32.pop %v431
      %v464 = verf.f32.pop %v432
      %v465 = verf.f32.pop %v433
      %v466 = verf.f32.pop %v434
      %v467 = verf.f32.pop %v435
      %v468 = verf.f32.pop %v436
      %v469 = verf.f32.pop %v437
      %v470 = verf.f32.pop %v438
      %v471 = verf.f32.pop %v439
      %v472 = verf.f32.pop %v440
      %v473 = verf.f32.pop %v441
      %v474 = verf.f32.pop %v442
      %v475 = verf.f32.pop %v443
      %v476 = verf.f32.pop %v444
      %v477 = verf.f32.pop %v445
      %v478 = verf.f32.pop %v446
      %v479 = verf.f32.pop %v447
      %v480 = vadd.f32 %v448, 1.0
      %v481 = vadd.f32 %v449, 1.0
      %v482 = vadd.f32 %v450, 1.0
      %v483 = vadd.f32 %v451, 1.0
      %v484 = vadd.f32 %v452, 1.0
      %v485 = vadd.f32 %v453, 1.0
      %v486 = vadd.f32 %v454, 1.0
      %v487 = vadd.f32 %v455, 1.0
      %v488 = vadd.f32 %v456, 1.0
      %v489 = vadd.f32 %v457, 1.0
      %v490 = vadd.f32 %v458, 1.0
      %v491 = vadd.f32 %v459, 1.0
      %v492 = vadd.f32 %v460, 1.0
      %v493 = vadd.f32 %v461, 1.0
      %v494 = vadd.f32 %v462, 1.0
      %v495 = vadd.f32 %v463, 1.0
      %v496 = vadd.f32 %v464, 1.0
      %v497 = vadd.f32 %v465, 1.0
      %v498 = vadd.f32 %v466, 1.0
      %v499 = vadd.f32 %v467, 1.0
      %v500 = vadd.f32 %v468, 1.0
      %v501 = vadd.f32 %v469, 1.0
      %v502 = vadd.f32 %v470, 1.0
      %v503 = vadd.f32 %v471, 1.0
      %v504 = vadd.f32 %v472, 1.0
      %v505 = vadd.f32 %v473, 1.0
      %v506 = vadd.f32 %v474, 1.0
      %v507 = vadd.f32 %v475, 1.0
      %v508 = vadd.f32 %v476, 1.0
      %v509 = vadd.f32 %v477, 1.0
      %v510 = vadd.f32 %v478, 1.0
      %v511 = vadd.f32 %v479, 1.0
      %v512 = vmul.f32 %v384, %v480
      %v513 = vmul.f32 %v385, %v481
      %v514 = vmul.f32 %v386, %v482
      %v515 = vmul.f32 %v387, %v483
      %v516 = vmul.f32 %v388, %v484
      %v517 = vmul.f32 %v389, %v485
      %v518 = vmul.f32 %v390, %v486
      %v519 = vmul.f32 %v391, %v487
      %v520 = vmul.f32 %v392, %v488
      %v521 = vmul.f32 %v393, %v489
      %v522 = vmul.f32 %v394, %v490
      %v523 = vmul.f32 %v395, %v491
      %v524 = vmul.f32 %v396, %v492
      %v525 = vmul.f32 %v397, %v493
      %v526 = vmul.f32 %v398, %v494
      %v527 = vmul.f32 %v399, %v495
      %v528 = vmul.f32 %v400, %v496
      %v529 = vmul.f32 %v401, %v497
      %v530 = vmul.f32 %v402, %v498
      %v531 = vmul.f32 %v403, %v499
      %v532 = vmul.f32 %v404, %v500
      %v533 = vmul.f32 %v405, %v501
      %v534 = vmul.f32 %v406, %v502
      %v535 = vmul.f32 %v407, %v503
      %v536 = vmul.f32 %v408, %v504
      %v537 = vmul.f32 %v409, %v505
      %v538 = vmul.f32 %v410, %v506
      %v539 = vmul.f32 %v411, %v507
      %v540 = vmul.f32 %v412, %v508
      %v541 = vmul.f32 %v413, %v509
      %v542 = vmul.f32 %v414, %v510
      %v543 = vmul.f32 %v415, %v511
      %v544 = vld [vmem:[%s265] sm:$0x7]
      %v545 = vld [vmem:[%s265 + $0x4] sm:$0x7]
      %v546 = vld [vmem:[%s265 + $0x8] sm:$0x7]
      %v547 = vlaneseq
      %v548 = vshrl.u32 %v547, 7
      %v549 = vadd.s32 %v548, 8
      %vm550 = vcmp.eq.s32.totalorder %v548, 0
      %vm551 = vcmp.eq.s32.totalorder %v549, 0
      %v552 = vrot.slane %v512, 7
      %v553 = vrot.slane %v514, 7
      %v554 = vrot.slane %v516, 7
      %v555 = vrot.slane %v518, 7
      %v556 = vrot.slane %v520, 7
      %v557 = vrot.slane %v522, 7
      %v558 = vrot.slane %v524, 7
      %v559 = vrot.slane %v526, 7
      %v560 = vrot.slane %v528, 7
      %v561 = vrot.slane %v530, 7
      %v562 = vrot.slane %v532, 7
      %v563 = vrot.slane %v534, 7
      %v564 = vrot.slane %v536, 7
      %v565 = vrot.slane %v538, 7
      %v566 = vrot.slane %v540, 7
      %v567 = vrot.slane %v542, 7
      %v568 = vrot.slane %v513, 7
      %v569 = vrot.slane %v515, 7
      %v570 = vrot.slane %v517, 7
      %v571 = vrot.slane %v519, 7
      %v572 = vrot.slane %v521, 7
      %v573 = vrot.slane %v523, 7
      %v574 = vrot.slane %v525, 7
      %v575 = vrot.slane %v527, 7
      %v576 = vrot.slane %v529, 7
      %v577 = vrot.slane %v531, 7
      %v578 = vrot.slane %v533, 7
      %v579 = vrot.slane %v535, 7
      %v580 = vrot.slane %v537, 7
      %v581 = vrot.slane %v539, 7
      %v582 = vrot.slane %v541, 7
      %v583 = vrot.slane %v543, 7
      %vm584 = vcmp.lt.s32.totalorder %v548, 1
      %v585 = vsel %vm584, %v552, %v568
      %v586 = vsel %vm584, %v553, %v569
      %v587 = vsel %vm584, %v554, %v570
      %v588 = vsel %vm584, %v555, %v571
      %v589 = vsel %vm584, %v556, %v572
      %v590 = vsel %vm584, %v557, %v573
      %v591 = vsel %vm584, %v558, %v574
      %v592 = vsel %vm584, %v559, %v575
      %v593 = vsel %vm584, %v560, %v576
      %v594 = vsel %vm584, %v561, %v577
      %v595 = vsel %vm584, %v562, %v578
      %v596 = vsel %vm584, %v563, %v579
      %v597 = vsel %vm584, %v564, %v580
      %v598 = vsel %vm584, %v565, %v581
      %v599 = vsel %vm584, %v566, %v582
      %v600 = vsel %vm584, %v567, %v583
      %v601 = vsel %vm584, %v568, %v552
      %v602 = vsel %vm584, %v569, %v553
      %v603 = vsel %vm584, %v570, %v554
      %v604 = vsel %vm584, %v571, %v555
      %v605 = vsel %vm584, %v572, %v556
      %v606 = vsel %vm584, %v573, %v557
      %v607 = vsel %vm584, %v574, %v558
      %v608 = vsel %vm584, %v575, %v559
      %v609 = vsel %vm584, %v576, %v560
      %v610 = vsel %vm584, %v577, %v561
      %v611 = vsel %vm584, %v578, %v562
      %v612 = vsel %vm584, %v579, %v563
      %v613 = vsel %vm584, %v580, %v564
      %v614 = vsel %vm584, %v581, %v565
      %v615 = vsel %vm584, %v582, %v566
      %v616 = vsel %vm584, %v583, %v567
      %v617 = vsel %vm550, 1, 0
      %v618 = vsel %vm551, 1, 0
      %vm619 = vcmp.eq.s32.totalorder %v617, 1
      %vm620 = vcmp.eq.s32.totalorder %v618, 1
      %v621 = vsel %vm619, 0.0, %v601
      %v622 = vsel %vm620, 0.0, %v585
      %v623 = vsel %vm619, 0.0, %v602
      %v624 = vsel %vm620, 0.0, %v586
      %v625 = vsel %vm619, 0.0, %v603
      %v626 = vsel %vm620, 0.0, %v587
      %v627 = vsel %vm619, 0.0, %v604
      %v628 = vsel %vm620, 0.0, %v588
      %v629 = vsel %vm619, 0.0, %v605
      %v630 = vsel %vm620, 0.0, %v589
      %v631 = vsel %vm619, 0.0, %v606
      %v632 = vsel %vm620, 0.0, %v590
      %v633 = vsel %vm619, 0.0, %v607
      %v634 = vsel %vm620, 0.0, %v591
      %v635 = vsel %vm619, 0.0, %v608
      %v636 = vsel %vm620, 0.0, %v592
      %v637 = vsel %vm619, 0.0, %v609
      %v638 = vsel %vm620, 0.0, %v593
      %v639 = vsel %vm619, 0.0, %v610
      %v640 = vsel %vm620, 0.0, %v594
      %v641 = vsel %vm619, 0.0, %v611
      %v642 = vsel %vm620, 0.0, %v595
      %v643 = vsel %vm619, 0.0, %v612
      %v644 = vsel %vm620, 0.0, %v596
      %v645 = vsel %vm619, 0.0, %v613
      %v646 = vsel %vm620, 0.0, %v597
      %v647 = vsel %vm619, 0.0, %v614
      %v648 = vsel %vm620, 0.0, %v598
      %v649 = vsel %vm619, 0.0, %v615
      %v650 = vsel %vm620, 0.0, %v599
      %v651 = vsel %vm619, 0.0, %v616
      %v652 = vsel %vm620, 0.0, %v600
      %vm653 = vcmp.eq.s32.totalorder %v548, 15
      %vm654 = vcmp.eq.s32.totalorder %v549, 15
      %v655 = vrot.slane %v512, 1
      %v656 = vrot.slane %v514, 1
      %v657 = vrot.slane %v516, 1
      %v658 = vrot.slane %v518, 1
      %v659 = vrot.slane %v520, 1
      %v660 = vrot.slane %v522, 1
      %v661 = vrot.slane %v524, 1
      %v662 = vrot.slane %v526, 1
      %v663 = vrot.slane %v528, 1
      %v664 = vrot.slane %v530, 1
      %v665 = vrot.slane %v532, 1
      %v666 = vrot.slane %v534, 1
      %v667 = vrot.slane %v536, 1
      %v668 = vrot.slane %v538, 1
      %v669 = vrot.slane %v540, 1
      %v670 = vrot.slane %v542, 1
      %v671 = vrot.slane %v513, 1
      %v672 = vrot.slane %v515, 1
      %v673 = vrot.slane %v517, 1
      %v674 = vrot.slane %v519, 1
      %v675 = vrot.slane %v521, 1
      %v676 = vrot.slane %v523, 1
      %v677 = vrot.slane %v525, 1
      %v678 = vrot.slane %v527, 1
      %v679 = vrot.slane %v529, 1
      %v680 = vrot.slane %v531, 1
      %v681 = vrot.slane %v533, 1
      %v682 = vrot.slane %v535, 1
      %v683 = vrot.slane %v537, 1
      %v684 = vrot.slane %v539, 1
      %v685 = vrot.slane %v541, 1
      %v686 = vrot.slane %v543, 1
      %vm687 = vcmp.lt.s32.totalorder %v548, 7
      %v688 = vsel %vm687, %v655, %v671
      %v689 = vsel %vm687, %v656, %v672
      %v690 = vsel %vm687, %v657, %v673
      %v691 = vsel %vm687, %v658, %v674
      %v692 = vsel %vm687, %v659, %v675
      %v693 = vsel %vm687, %v660, %v676
      %v694 = vsel %vm687, %v661, %v677
      %v695 = vsel %vm687, %v662, %v678
      %v696 = vsel %vm687, %v663, %v679
      %v697 = vsel %vm687, %v664, %v680
      %v698 = vsel %vm687, %v665, %v681
      %v699 = vsel %vm687, %v666, %v682
      %v700 = vsel %vm687, %v667, %v683
      %v701 = vsel %vm687, %v668, %v684
      %v702 = vsel %vm687, %v669, %v685
      %v703 = vsel %vm687, %v670, %v686
      %v704 = vsel %vm687, %v671, %v655
      %v705 = vsel %vm687, %v672, %v656
      %v706 = vsel %vm687, %v673, %v657
      %v707 = vsel %vm687, %v674, %v658
      %v708 = vsel %vm687, %v675, %v659
      %v709 = vsel %vm687, %v676, %v660
      %v710 = vsel %vm687, %v677, %v661
      %v711 = vsel %vm687, %v678, %v662
      %v712 = vsel %vm687, %v679, %v663
      %v713 = vsel %vm687, %v680, %v664
      %v714 = vsel %vm687, %v681, %v665
      %v715 = vsel %vm687, %v682, %v666
      %v716 = vsel %vm687, %v683, %v667
      %v717 = vsel %vm687, %v684, %v668
      %v718 = vsel %vm687, %v685, %v669
      %v719 = vsel %vm687, %v686, %v670
      %v720 = vsel %vm653, 1, 0
      %v721 = vsel %vm654, 1, 0
      %vm722 = vcmp.eq.s32.totalorder %v720, 1
      %vm723 = vcmp.eq.s32.totalorder %v721, 1
      %v724 = vsel %vm722, 0.0, %v688
      %v725 = vsel %vm723, 0.0, %v704
      %v726 = vsel %vm722, 0.0, %v689
      %v727 = vsel %vm723, 0.0, %v705
      %v728 = vsel %vm722, 0.0, %v690
      %v729 = vsel %vm723, 0.0, %v706
      %v730 = vsel %vm722, 0.0, %v691
      %v731 = vsel %vm723, 0.0, %v707
      %v732 = vsel %vm722, 0.0, %v692
      %v733 = vsel %vm723, 0.0, %v708
      %v734 = vsel %vm722, 0.0, %v693
      %v735 = vsel %vm723, 0.0, %v709
      %v736 = vsel %vm722, 0.0, %v694
      %v737 = vsel %vm723, 0.0, %v710
      %v738 = vsel %vm722, 0.0, %v695
      %v739 = vsel %vm723, 0.0, %v711
      %v740 = vsel %vm722, 0.0, %v696
      %v741 = vsel %vm723, 0.0, %v712
      %v742 = vsel %vm722, 0.0, %v697
      %v743 = vsel %vm723, 0.0, %v713
      %v744 = vsel %vm722, 0.0, %v698
      %v745 = vsel %vm723, 0.0, %v714
      %v746 = vsel %vm722, 0.0, %v699
      %v747 = vsel %vm723, 0.0, %v715
      %v748 = vsel %vm722, 0.0, %v700
      %v749 = vsel %vm723, 0.0, %v716
      %v750 = vsel %vm722, 0.0, %v701
      %v751 = vsel %vm723, 0.0, %v717
      %v752 = vsel %vm722, 0.0, %v702
      %v753 = vsel %vm723, 0.0, %v718
      %v754 = vsel %vm722, 0.0, %v703
      %v755 = vsel %vm723, 0.0, %v719
      %v756 = vlaneseq
      %v757 = vshrl.u32 %v756, 7
      %v758 = vsub.s32 0, %v757
      %v759 = vrot.slane %v544, %v758
      %v760 = vmul.f32 %v621, %v759
      %v761 = vmul.f32 %v622, %v759
      %v762 = vmul.f32 %v623, %v759
      %v763 = vmul.f32 %v624, %v759
      %v764 = vmul.f32 %v625, %v759
      %v765 = vmul.f32 %v626, %v759
      %v766 = vmul.f32 %v627, %v759
      %v767 = vmul.f32 %v628, %v759
      %v768 = vmul.f32 %v629, %v759
      %v769 = vmul.f32 %v630, %v759
      %v770 = vmul.f32 %v631, %v759
      %v771 = vmul.f32 %v632, %v759
      %v772 = vmul.f32 %v633, %v759
      %v773 = vmul.f32 %v634, %v759
      %v774 = vmul.f32 %v635, %v759
      %v775 = vmul.f32 %v636, %v759
      %v776 = vmul.f32 %v637, %v759
      %v777 = vmul.f32 %v638, %v759
      %v778 = vmul.f32 %v639, %v759
      %v779 = vmul.f32 %v640, %v759
      %v780 = vmul.f32 %v641, %v759
      %v781 = vmul.f32 %v642, %v759
      %v782 = vmul.f32 %v643, %v759
      %v783 = vmul.f32 %v644, %v759
      %v784 = vmul.f32 %v645, %v759
      %v785 = vmul.f32 %v646, %v759
      %v786 = vmul.f32 %v647, %v759
      %v787 = vmul.f32 %v648, %v759
      %v788 = vmul.f32 %v649, %v759
      %v789 = vmul.f32 %v650, %v759
      %v790 = vlaneseq
      %v791 = vshrl.u32 %v790, 7
      %v792 = vsub.s32 1, %v791
      %v793 = vrot.slane %v544, %v792
      %v794 = vmul.f32 %v512, %v793
      %v795 = vmul.f32 %v513, %v793
      %v796 = vmul.f32 %v514, %v793
      %v797 = vmul.f32 %v515, %v793
      %v798 = vmul.f32 %v516, %v793
      %v799 = vmul.f32 %v517, %v793
      %v800 = vmul.f32 %v518, %v793
      %v801 = vmul.f32 %v519, %v793
      %v802 = vmul.f32 %v520, %v793
      %v803 = vmul.f32 %v521, %v793
      %v804 = vmul.f32 %v522, %v793
      %v805 = vmul.f32 %v523, %v793
      %v806 = vmul.f32 %v524, %v793
      %v807 = vmul.f32 %v525, %v793
      %v808 = vmul.f32 %v526, %v793
      %v809 = vmul.f32 %v527, %v793
      %v810 = vmul.f32 %v528, %v793
      %v811 = vmul.f32 %v529, %v793
      %v812 = vmul.f32 %v530, %v793
      %v813 = vmul.f32 %v531, %v793
      %v814 = vmul.f32 %v532, %v793
      %v815 = vmul.f32 %v533, %v793
      %v816 = vmul.f32 %v534, %v793
      %v817 = vmul.f32 %v535, %v793
      %v818 = vmul.f32 %v536, %v793
      %v819 = vmul.f32 %v537, %v793
      %v820 = vmul.f32 %v538, %v793
      %v821 = vmul.f32 %v539, %v793
      %v822 = vmul.f32 %v540, %v793
      %v823 = vmul.f32 %v541, %v793
      %v824 = vadd.f32 %v760, %v794
      %v825 = vadd.f32 %v761, %v795
      %v826 = vadd.f32 %v762, %v796
      %v827 = vadd.f32 %v763, %v797
      %v828 = vadd.f32 %v764, %v798
      %v829 = vadd.f32 %v765, %v799
      %v830 = vadd.f32 %v766, %v800
      %v831 = vadd.f32 %v767, %v801
      %v832 = vadd.f32 %v768, %v802
      %v833 = vadd.f32 %v769, %v803
      %v834 = vadd.f32 %v770, %v804
      %v835 = vadd.f32 %v771, %v805
      %v836 = vadd.f32 %v772, %v806
      %v837 = vadd.f32 %v773, %v807
      %v838 = vadd.f32 %v774, %v808
      %v839 = vadd.f32 %v775, %v809
      %v840 = vadd.f32 %v776, %v810
      %v841 = vadd.f32 %v777, %v811
      %v842 = vadd.f32 %v778, %v812
      %v843 = vadd.f32 %v779, %v813
      %v844 = vadd.f32 %v780, %v814
      %v845 = vadd.f32 %v781, %v815
      %v846 = vadd.f32 %v782, %v816
      %v847 = vadd.f32 %v783, %v817
      %v848 = vadd.f32 %v784, %v818
      %v849 = vadd.f32 %v785, %v819
      %v850 = vadd.f32 %v786, %v820
      %v851 = vadd.f32 %v787, %v821
      %v852 = vadd.f32 %v788, %v822
      %v853 = vadd.f32 %v789, %v823
      %v854 = vlaneseq
      %v855 = vshrl.u32 %v854, 7
      %v856 = vsub.s32 2, %v855
      %v857 = vrot.slane %v544, %v856
      %v858 = vmul.f32 %v724, %v857
      %v859 = vmul.f32 %v725, %v857
      %v860 = vmul.f32 %v726, %v857
      %v861 = vmul.f32 %v727, %v857
      %v862 = vmul.f32 %v728, %v857
      %v863 = vmul.f32 %v729, %v857
      %v864 = vmul.f32 %v730, %v857
      %v865 = vmul.f32 %v731, %v857
      %v866 = vmul.f32 %v732, %v857
      %v867 = vmul.f32 %v733, %v857
      %v868 = vmul.f32 %v734, %v857
      %v869 = vmul.f32 %v735, %v857
      %v870 = vmul.f32 %v736, %v857
      %v871 = vmul.f32 %v737, %v857
      %v872 = vmul.f32 %v738, %v857
      %v873 = vmul.f32 %v739, %v857
      %v874 = vmul.f32 %v740, %v857
      %v875 = vmul.f32 %v741, %v857
      %v876 = vmul.f32 %v742, %v857
      %v877 = vmul.f32 %v743, %v857
      %v878 = vmul.f32 %v744, %v857
      %v879 = vmul.f32 %v745, %v857
      %v880 = vmul.f32 %v746, %v857
      %v881 = vmul.f32 %v747, %v857
      %v882 = vmul.f32 %v748, %v857
      %v883 = vmul.f32 %v749, %v857
      %v884 = vmul.f32 %v750, %v857
      %v885 = vmul.f32 %v751, %v857
      %v886 = vmul.f32 %v752, %v857
      %v887 = vmul.f32 %v753, %v857
      %v888 = vadd.f32 %v824, %v858
      %v889 = vadd.f32 %v825, %v859
      %v890 = vadd.f32 %v826, %v860
      %v891 = vadd.f32 %v827, %v861
      %v892 = vadd.f32 %v828, %v862
      %v893 = vadd.f32 %v829, %v863
      %v894 = vadd.f32 %v830, %v864
      %v895 = vadd.f32 %v831, %v865
      %v896 = vadd.f32 %v832, %v866
      %v897 = vadd.f32 %v833, %v867
      %v898 = vadd.f32 %v834, %v868
      %v899 = vadd.f32 %v835, %v869
      %v900 = vadd.f32 %v836, %v870
      %v901 = vadd.f32 %v837, %v871
      %v902 = vadd.f32 %v838, %v872
      %v903 = vadd.f32 %v839, %v873
      %v904 = vadd.f32 %v840, %v874
      %v905 = vadd.f32 %v841, %v875
      %v906 = vadd.f32 %v842, %v876
      %v907 = vadd.f32 %v843, %v877
      %v908 = vadd.f32 %v844, %v878
      %v909 = vadd.f32 %v845, %v879
      %v910 = vadd.f32 %v846, %v880
      %v911 = vadd.f32 %v847, %v881
      %v912 = vadd.f32 %v848, %v882
      %v913 = vadd.f32 %v849, %v883
      %v914 = vadd.f32 %v850, %v884
      %v915 = vadd.f32 %v851, %v885
      %v916 = vadd.f32 %v852, %v886
      %v917 = vadd.f32 %v853, %v887
      %v918 = vlaneseq
      %v919 = vshrl.u32 %v918, 7
      %v920 = vsub.s32 0, %v919
      %v921 = vrot.slane %v545, %v920
      %v922 = vmul.f32 %v621, %v921
      %v923 = vmul.f32 %v622, %v921
      %v924 = vmul.f32 %v623, %v921
      %v925 = vmul.f32 %v624, %v921
      %v926 = vmul.f32 %v625, %v921
      %v927 = vmul.f32 %v626, %v921
      %v928 = vmul.f32 %v627, %v921
      %v929 = vmul.f32 %v628, %v921
      %v930 = vmul.f32 %v629, %v921
      %v931 = vmul.f32 %v630, %v921
      %v932 = vmul.f32 %v631, %v921
      %v933 = vmul.f32 %v632, %v921
      %v934 = vmul.f32 %v633, %v921
      %v935 = vmul.f32 %v634, %v921
      %v936 = vmul.f32 %v635, %v921
      %v937 = vmul.f32 %v636, %v921
      %v938 = vmul.f32 %v637, %v921
      %v939 = vmul.f32 %v638, %v921
      %v940 = vmul.f32 %v639, %v921
      %v941 = vmul.f32 %v640, %v921
      %v942 = vmul.f32 %v641, %v921
      %v943 = vmul.f32 %v642, %v921
      %v944 = vmul.f32 %v643, %v921
      %v945 = vmul.f32 %v644, %v921
      %v946 = vmul.f32 %v645, %v921
      %v947 = vmul.f32 %v646, %v921
      %v948 = vmul.f32 %v647, %v921
      %v949 = vmul.f32 %v648, %v921
      %v950 = vmul.f32 %v649, %v921
      %v951 = vmul.f32 %v650, %v921
      %v952 = vmul.f32 %v651, %v921
      %v953 = vmul.f32 %v652, %v921
      %v954 = vlaneseq
      %v955 = vshrl.u32 %v954, 7
      %v956 = vsub.s32 1, %v955
      %v957 = vrot.slane %v545, %v956
      %v958 = vmul.f32 %v512, %v957
      %v959 = vmul.f32 %v513, %v957
      %v960 = vmul.f32 %v514, %v957
      %v961 = vmul.f32 %v515, %v957
      %v962 = vmul.f32 %v516, %v957
      %v963 = vmul.f32 %v517, %v957
      %v964 = vmul.f32 %v518, %v957
      %v965 = vmul.f32 %v519, %v957
      %v966 = vmul.f32 %v520, %v957
      %v967 = vmul.f32 %v521, %v957
      %v968 = vmul.f32 %v522, %v957
      %v969 = vmul.f32 %v523, %v957
      %v970 = vmul.f32 %v524, %v957
      %v971 = vmul.f32 %v525, %v957
      %v972 = vmul.f32 %v526, %v957
      %v973 = vmul.f32 %v527, %v957
      %v974 = vmul.f32 %v528, %v957
      %v975 = vmul.f32 %v529, %v957
      %v976 = vmul.f32 %v530, %v957
      %v977 = vmul.f32 %v531, %v957
      %v978 = vmul.f32 %v532, %v957
      %v979 = vmul.f32 %v533, %v957
      %v980 = vmul.f32 %v534, %v957
      %v981 = vmul.f32 %v535, %v957
      %v982 = vmul.f32 %v536, %v957
      %v983 = vmul.f32 %v537, %v957
      %v984 = vmul.f32 %v538, %v957
      %v985 = vmul.f32 %v539, %v957
      %v986 = vmul.f32 %v540, %v957
      %v987 = vmul.f32 %v541, %v957
      %v988 = vmul.f32 %v542, %v957
      %v989 = vmul.f32 %v543, %v957
      %v990 = vadd.f32 %v922, %v958
      %v991 = vadd.f32 %v923, %v959
      %v992 = vadd.f32 %v924, %v960
      %v993 = vadd.f32 %v925, %v961
      %v994 = vadd.f32 %v926, %v962
      %v995 = vadd.f32 %v927, %v963
      %v996 = vadd.f32 %v928, %v964
      %v997 = vadd.f32 %v929, %v965
      %v998 = vadd.f32 %v930, %v966
      %v999 = vadd.f32 %v931, %v967
      %v1000 = vadd.f32 %v932, %v968
      %v1001 = vadd.f32 %v933, %v969
      %v1002 = vadd.f32 %v934, %v970
      %v1003 = vadd.f32 %v935, %v971
      %v1004 = vadd.f32 %v936, %v972
      %v1005 = vadd.f32 %v937, %v973
      %v1006 = vadd.f32 %v938, %v974
      %v1007 = vadd.f32 %v939, %v975
      %v1008 = vadd.f32 %v940, %v976
      %v1009 = vadd.f32 %v941, %v977
      %v1010 = vadd.f32 %v942, %v978
      %v1011 = vadd.f32 %v943, %v979
      %v1012 = vadd.f32 %v944, %v980
      %v1013 = vadd.f32 %v945, %v981
      %v1014 = vadd.f32 %v946, %v982
      %v1015 = vadd.f32 %v947, %v983
      %v1016 = vadd.f32 %v948, %v984
      %v1017 = vadd.f32 %v949, %v985
      %v1018 = vadd.f32 %v950, %v986
      %v1019 = vadd.f32 %v951, %v987
      %v1020 = vadd.f32 %v952, %v988
      %v1021 = vadd.f32 %v953, %v989
      %v1022 = vlaneseq
      %v1023 = vshrl.u32 %v1022, 7
      %v1024 = vsub.s32 2, %v1023
      %v1025 = vrot.slane %v545, %v1024
      %v1026 = vmul.f32 %v724, %v1025
      %v1027 = vmul.f32 %v725, %v1025
      %v1028 = vmul.f32 %v726, %v1025
      %v1029 = vmul.f32 %v727, %v1025
      %v1030 = vmul.f32 %v728, %v1025
      %v1031 = vmul.f32 %v729, %v1025
      %v1032 = vmul.f32 %v730, %v1025
      %v1033 = vmul.f32 %v731, %v1025
      %v1034 = vmul.f32 %v732, %v1025
      %v1035 = vmul.f32 %v733, %v1025
      %v1036 = vmul.f32 %v734, %v1025
      %v1037 = vmul.f32 %v735, %v1025
      %v1038 = vmul.f32 %v736, %v1025
      %v1039 = vmul.f32 %v737, %v1025
      %v1040 = vmul.f32 %v738, %v1025
      %v1041 = vmul.f32 %v739, %v1025
      %v1042 = vmul.f32 %v740, %v1025
      %v1043 = vmul.f32 %v741, %v1025
      %v1044 = vmul.f32 %v742, %v1025
      %v1045 = vmul.f32 %v743, %v1025
      %v1046 = vmul.f32 %v744, %v1025
      %v1047 = vmul.f32 %v745, %v1025
      %v1048 = vmul.f32 %v746, %v1025
      %v1049 = vmul.f32 %v747, %v1025
      %v1050 = vmul.f32 %v748, %v1025
      %v1051 = vmul.f32 %v749, %v1025
      %v1052 = vmul.f32 %v750, %v1025
      %v1053 = vmul.f32 %v751, %v1025
      %v1054 = vmul.f32 %v752, %v1025
      %v1055 = vmul.f32 %v753, %v1025
      %v1056 = vmul.f32 %v754, %v1025
      %v1057 = vmul.f32 %v755, %v1025
      %v1058 = vadd.f32 %v990, %v1026
      %v1059 = vadd.f32 %v991, %v1027
      %v1060 = vadd.f32 %v992, %v1028
      %v1061 = vadd.f32 %v993, %v1029
      %v1062 = vadd.f32 %v994, %v1030
      %v1063 = vadd.f32 %v995, %v1031
      %v1064 = vadd.f32 %v996, %v1032
      %v1065 = vadd.f32 %v997, %v1033
      %v1066 = vadd.f32 %v998, %v1034
      %v1067 = vadd.f32 %v999, %v1035
      %v1068 = vadd.f32 %v1000, %v1036
      %v1069 = vadd.f32 %v1001, %v1037
      %v1070 = vadd.f32 %v1002, %v1038
      %v1071 = vadd.f32 %v1003, %v1039
      %v1072 = vadd.f32 %v1004, %v1040
      %v1073 = vadd.f32 %v1005, %v1041
      %v1074 = vadd.f32 %v1006, %v1042
      %v1075 = vadd.f32 %v1007, %v1043
      %v1076 = vadd.f32 %v1008, %v1044
      %v1077 = vadd.f32 %v1009, %v1045
      %v1078 = vadd.f32 %v1010, %v1046
      %v1079 = vadd.f32 %v1011, %v1047
      %v1080 = vadd.f32 %v1012, %v1048
      %v1081 = vadd.f32 %v1013, %v1049
      %v1082 = vadd.f32 %v1014, %v1050
      %v1083 = vadd.f32 %v1015, %v1051
      %v1084 = vadd.f32 %v1016, %v1052
      %v1085 = vadd.f32 %v1017, %v1053
      %v1086 = vadd.f32 %v1018, %v1054
      %v1087 = vadd.f32 %v1019, %v1055
      %v1088 = vadd.f32 %v1020, %v1056
      %v1089 = vadd.f32 %v1021, %v1057
      %v1090 = vlaneseq
      %v1091 = vshrl.u32 %v1090, 7
      %v1092 = vsub.s32 0, %v1091
      %v1093 = vrot.slane %v546, %v1092
      %v1094 = vmul.f32 %v623, %v1093
      %v1095 = vmul.f32 %v624, %v1093
      %v1096 = vmul.f32 %v625, %v1093
      %v1097 = vmul.f32 %v626, %v1093
      %v1098 = vmul.f32 %v627, %v1093
      %v1099 = vmul.f32 %v628, %v1093
      %v1100 = vmul.f32 %v629, %v1093
      %v1101 = vmul.f32 %v630, %v1093
      %v1102 = vmul.f32 %v631, %v1093
      %v1103 = vmul.f32 %v632, %v1093
      %v1104 = vmul.f32 %v633, %v1093
      %v1105 = vmul.f32 %v634, %v1093
      %v1106 = vmul.f32 %v635, %v1093
      %v1107 = vmul.f32 %v636, %v1093
      %v1108 = vmul.f32 %v637, %v1093
      %v1109 = vmul.f32 %v638, %v1093
      %v1110 = vmul.f32 %v639, %v1093
      %v1111 = vmul.f32 %v640, %v1093
      %v1112 = vmul.f32 %v641, %v1093
      %v1113 = vmul.f32 %v642, %v1093
      %v1114 = vmul.f32 %v643, %v1093
      %v1115 = vmul.f32 %v644, %v1093
      %v1116 = vmul.f32 %v645, %v1093
      %v1117 = vmul.f32 %v646, %v1093
      %v1118 = vmul.f32 %v647, %v1093
      %v1119 = vmul.f32 %v648, %v1093
      %v1120 = vmul.f32 %v649, %v1093
      %v1121 = vmul.f32 %v650, %v1093
      %v1122 = vmul.f32 %v651, %v1093
      %v1123 = vmul.f32 %v652, %v1093
      %v1124 = vlaneseq
      %v1125 = vshrl.u32 %v1124, 7
      %v1126 = vsub.s32 1, %v1125
      %v1127 = vrot.slane %v546, %v1126
      %v1128 = vmul.f32 %v514, %v1127
      %v1129 = vmul.f32 %v515, %v1127
      %v1130 = vmul.f32 %v516, %v1127
      %v1131 = vmul.f32 %v517, %v1127
      %v1132 = vmul.f32 %v518, %v1127
      %v1133 = vmul.f32 %v519, %v1127
      %v1134 = vmul.f32 %v520, %v1127
      %v1135 = vmul.f32 %v521, %v1127
      %v1136 = vmul.f32 %v522, %v1127
      %v1137 = vmul.f32 %v523, %v1127
      %v1138 = vmul.f32 %v524, %v1127
      %v1139 = vmul.f32 %v525, %v1127
      %v1140 = vmul.f32 %v526, %v1127
      %v1141 = vmul.f32 %v527, %v1127
      %v1142 = vmul.f32 %v528, %v1127
      %v1143 = vmul.f32 %v529, %v1127
      %v1144 = vmul.f32 %v530, %v1127
      %v1145 = vmul.f32 %v531, %v1127
      %v1146 = vmul.f32 %v532, %v1127
      %v1147 = vmul.f32 %v533, %v1127
      %v1148 = vmul.f32 %v534, %v1127
      %v1149 = vmul.f32 %v535, %v1127
      %v1150 = vmul.f32 %v536, %v1127
      %v1151 = vmul.f32 %v537, %v1127
      %v1152 = vmul.f32 %v538, %v1127
      %v1153 = vmul.f32 %v539, %v1127
      %v1154 = vmul.f32 %v540, %v1127
      %v1155 = vmul.f32 %v541, %v1127
      %v1156 = vmul.f32 %v542, %v1127
      %v1157 = vmul.f32 %v543, %v1127
      %v1158 = vadd.f32 %v1094, %v1128
      %v1159 = vadd.f32 %v1095, %v1129
      %v1160 = vadd.f32 %v1096, %v1130
      %v1161 = vadd.f32 %v1097, %v1131
      %v1162 = vadd.f32 %v1098, %v1132
      %v1163 = vadd.f32 %v1099, %v1133
      %v1164 = vadd.f32 %v1100, %v1134
      %v1165 = vadd.f32 %v1101, %v1135
      %v1166 = vadd.f32 %v1102, %v1136
      %v1167 = vadd.f32 %v1103, %v1137
      %v1168 = vadd.f32 %v1104, %v1138
      %v1169 = vadd.f32 %v1105, %v1139
      %v1170 = vadd.f32 %v1106, %v1140
      %v1171 = vadd.f32 %v1107, %v1141
      %v1172 = vadd.f32 %v1108, %v1142
      %v1173 = vadd.f32 %v1109, %v1143
      %v1174 = vadd.f32 %v1110, %v1144
      %v1175 = vadd.f32 %v1111, %v1145
      %v1176 = vadd.f32 %v1112, %v1146
      %v1177 = vadd.f32 %v1113, %v1147
      %v1178 = vadd.f32 %v1114, %v1148
      %v1179 = vadd.f32 %v1115, %v1149
      %v1180 = vadd.f32 %v1116, %v1150
      %v1181 = vadd.f32 %v1117, %v1151
      %v1182 = vadd.f32 %v1118, %v1152
      %v1183 = vadd.f32 %v1119, %v1153
      %v1184 = vadd.f32 %v1120, %v1154
      %v1185 = vadd.f32 %v1121, %v1155
      %v1186 = vadd.f32 %v1122, %v1156
      %v1187 = vadd.f32 %v1123, %v1157
      %v1188 = vlaneseq
      %v1189 = vshrl.u32 %v1188, 7
      %v1190 = vsub.s32 2, %v1189
      %v1191 = vrot.slane %v546, %v1190
      %v1192 = vmul.f32 %v726, %v1191
      %v1193 = vmul.f32 %v727, %v1191
      %v1194 = vmul.f32 %v728, %v1191
      %v1195 = vmul.f32 %v729, %v1191
      %v1196 = vmul.f32 %v730, %v1191
      %v1197 = vmul.f32 %v731, %v1191
      %v1198 = vmul.f32 %v732, %v1191
      %v1199 = vmul.f32 %v733, %v1191
      %v1200 = vmul.f32 %v734, %v1191
      %v1201 = vmul.f32 %v735, %v1191
      %v1202 = vmul.f32 %v736, %v1191
      %v1203 = vmul.f32 %v737, %v1191
      %v1204 = vmul.f32 %v738, %v1191
      %v1205 = vmul.f32 %v739, %v1191
      %v1206 = vmul.f32 %v740, %v1191
      %v1207 = vmul.f32 %v741, %v1191
      %v1208 = vmul.f32 %v742, %v1191
      %v1209 = vmul.f32 %v743, %v1191
      %v1210 = vmul.f32 %v744, %v1191
      %v1211 = vmul.f32 %v745, %v1191
      %v1212 = vmul.f32 %v746, %v1191
      %v1213 = vmul.f32 %v747, %v1191
      %v1214 = vmul.f32 %v748, %v1191
      %v1215 = vmul.f32 %v749, %v1191
      %v1216 = vmul.f32 %v750, %v1191
      %v1217 = vmul.f32 %v751, %v1191
      %v1218 = vmul.f32 %v752, %v1191
      %v1219 = vmul.f32 %v753, %v1191
      %v1220 = vmul.f32 %v754, %v1191
      %v1221 = vmul.f32 %v755, %v1191
      %v1222 = vadd.f32 %v1158, %v1192
      %v1223 = vadd.f32 %v1159, %v1193
      %v1224 = vadd.f32 %v1160, %v1194
      %v1225 = vadd.f32 %v1161, %v1195
      %v1226 = vadd.f32 %v1162, %v1196
      %v1227 = vadd.f32 %v1163, %v1197
      %v1228 = vadd.f32 %v1164, %v1198
      %v1229 = vadd.f32 %v1165, %v1199
      %v1230 = vadd.f32 %v1166, %v1200
      %v1231 = vadd.f32 %v1167, %v1201
      %v1232 = vadd.f32 %v1168, %v1202
      %v1233 = vadd.f32 %v1169, %v1203
      %v1234 = vadd.f32 %v1170, %v1204
      %v1235 = vadd.f32 %v1171, %v1205
      %v1236 = vadd.f32 %v1172, %v1206
      %v1237 = vadd.f32 %v1173, %v1207
      %v1238 = vadd.f32 %v1174, %v1208
      %v1239 = vadd.f32 %v1175, %v1209
      %v1240 = vadd.f32 %v1176, %v1210
      %v1241 = vadd.f32 %v1177, %v1211
      %v1242 = vadd.f32 %v1178, %v1212
      %v1243 = vadd.f32 %v1179, %v1213
      %v1244 = vadd.f32 %v1180, %v1214
      %v1245 = vadd.f32 %v1181, %v1215
      %v1246 = vadd.f32 %v1182, %v1216
      %v1247 = vadd.f32 %v1183, %v1217
      %v1248 = vadd.f32 %v1184, %v1218
      %v1249 = vadd.f32 %v1185, %v1219
      %v1250 = vadd.f32 %v1186, %v1220
      %v1251 = vadd.f32 %v1187, %v1221
      %v1252 = vadd.f32 %v1058, 0.0
      %v1253 = vadd.f32 %v1059, 0.0
      %v1254 = vadd.f32 %v1060, %v888
      %v1255 = vadd.f32 %v1061, %v889
      %v1256 = vadd.f32 %v1062, %v890
      %v1257 = vadd.f32 %v1063, %v891
      %v1258 = vadd.f32 %v1064, %v892
      %v1259 = vadd.f32 %v1065, %v893
      %v1260 = vadd.f32 %v1066, %v894
      %v1261 = vadd.f32 %v1067, %v895
      %v1262 = vadd.f32 %v1068, %v896
      %v1263 = vadd.f32 %v1069, %v897
      %v1264 = vadd.f32 %v1070, %v898
      %v1265 = vadd.f32 %v1071, %v899
      %v1266 = vadd.f32 %v1072, %v900
      %v1267 = vadd.f32 %v1073, %v901
      %v1268 = vadd.f32 %v1074, %v902
      %v1269 = vadd.f32 %v1075, %v903
      %v1270 = vadd.f32 %v1076, %v904
      %v1271 = vadd.f32 %v1077, %v905
      %v1272 = vadd.f32 %v1078, %v906
      %v1273 = vadd.f32 %v1079, %v907
      %v1274 = vadd.f32 %v1080, %v908
      %v1275 = vadd.f32 %v1081, %v909
      %v1276 = vadd.f32 %v1082, %v910
      %v1277 = vadd.f32 %v1083, %v911
      %v1278 = vadd.f32 %v1084, %v912
      %v1279 = vadd.f32 %v1085, %v913
      %v1280 = vadd.f32 %v1086, %v914
      %v1281 = vadd.f32 %v1087, %v915
      %v1282 = vadd.f32 %v1088, %v916
      %v1283 = vadd.f32 %v1089, %v917
      %v1284 = vadd.f32 %v1252, %v1222
      %v1285 = vadd.f32 %v1253, %v1223
      %v1286 = vadd.f32 %v1254, %v1224
      %v1287 = vadd.f32 %v1255, %v1225
      %v1288 = vadd.f32 %v1256, %v1226
      %v1289 = vadd.f32 %v1257, %v1227
      %v1290 = vadd.f32 %v1258, %v1228
      %v1291 = vadd.f32 %v1259, %v1229
      %v1292 = vadd.f32 %v1260, %v1230
      %v1293 = vadd.f32 %v1261, %v1231
      %v1294 = vadd.f32 %v1262, %v1232
      %v1295 = vadd.f32 %v1263, %v1233
      %v1296 = vadd.f32 %v1264, %v1234
      %v1297 = vadd.f32 %v1265, %v1235
      %v1298 = vadd.f32 %v1266, %v1236
      %v1299 = vadd.f32 %v1267, %v1237
      %v1300 = vadd.f32 %v1268, %v1238
      %v1301 = vadd.f32 %v1269, %v1239
      %v1302 = vadd.f32 %v1270, %v1240
      %v1303 = vadd.f32 %v1271, %v1241
      %v1304 = vadd.f32 %v1272, %v1242
      %v1305 = vadd.f32 %v1273, %v1243
      %v1306 = vadd.f32 %v1274, %v1244
      %v1307 = vadd.f32 %v1275, %v1245
      %v1308 = vadd.f32 %v1276, %v1246
      %v1309 = vadd.f32 %v1277, %v1247
      %v1310 = vadd.f32 %v1278, %v1248
      %v1311 = vadd.f32 %v1279, %v1249
      %v1312 = vadd.f32 %v1280, %v1250
      %v1313 = vadd.f32 %v1281, %v1251
      %v1314 = vadd.f32 %v1282, 0.0
      %v1315 = vadd.f32 %v1283, 0.0
      %1316 = vst [vmem:[%s273] sm:$0xff] %v1284
      %1317 = vst [vmem:[%s273 + $0x8] sm:$0xff] %v1285
      %1318 = vst [vmem:[%s273 + $0x10] sm:$0xff] %v1286
      %1319 = vst [vmem:[%s273 + $0x18] sm:$0xff] %v1287
      %1320 = vst [vmem:[%s273 + $0x20] sm:$0xff] %v1288
      %1321 = vst [vmem:[%s273 + $0x28] sm:$0xff] %v1289
      %1322 = vst [vmem:[%s273 + $0x30] sm:$0xff] %v1290
      %1323 = vst [vmem:[%s273 + $0x38] sm:$0xff] %v1291
      %1324 = vst [vmem:[%s273 + $0x40] sm:$0xff] %v1292
      %1325 = vst [vmem:[%s273 + $0x48] sm:$0xff] %v1293
      %1326 = vst [vmem:[%s273 + $0x50] sm:$0xff] %v1294
      %1327 = vst [vmem:[%s273 + $0x58] sm:$0xff] %v1295
      %1328 = vst [vmem:[%s273 + $0x60] sm:$0xff] %v1296
      %1329 = vst [vmem:[%s273 + $0x68] sm:$0xff] %v1297
      %1330 = vst [vmem:[%s273 + $0x70] sm:$0xff] %v1298
      %1331 = vst [vmem:[%s273 + $0x78] sm:$0xff] %v1299
      %1332 = vst [vmem:[%s273 + $0x80] sm:$0xff] %v1300
      %1333 = vst [vmem:[%s273 + $0x88] sm:$0xff] %v1301
      %1334 = vst [vmem:[%s273 + $0x90] sm:$0xff] %v1302
      %1335 = vst [vmem:[%s273 + $0x98] sm:$0xff] %v1303
      %1336 = vst [vmem:[%s273 + $0xa0] sm:$0xff] %v1304
      %1337 = vst [vmem:[%s273 + $0xa8] sm:$0xff] %v1305
      %1338 = vst [vmem:[%s273 + $0xb0] sm:$0xff] %v1306
      %1339 = vst [vmem:[%s273 + $0xb8] sm:$0xff] %v1307
      %1340 = vst [vmem:[%s273 + $0xc0] sm:$0xff] %v1308
      %1341 = vst [vmem:[%s273 + $0xc8] sm:$0xff] %v1309
      %1342 = vst [vmem:[%s273 + $0xd0] sm:$0xff] %v1310
      %1343 = vst [vmem:[%s273 + $0xd8] sm:$0xff] %v1311
      %1344 = vst [vmem:[%s273 + $0xe0] sm:$0xff] %v1312
      %1345 = vst [vmem:[%s273 + $0xe8] sm:$0xff] %v1313
      %1346 = vst [vmem:[%s273 + $0xf0] sm:$0xff] %v1314
      %1347 = vst [vmem:[%s273 + $0xf8] sm:$0xff] %v1315
      %p1348 = scmp.lt.s32.totalorder %s20, 1
      %s1349 = scalar_select %p1348, %s20, 1
      %p1350 = scmp.lt.s32.totalorder %s19, 0
      %s1351 = scalar_select %p1350, %s19, 0
      %s1352 = smul.addr %s1349, 32
      %s1353 = sadd.s32 %s1351, %s1352
      %s1354 = smul.addr %s1353, 8
      %s1355 = scalar_lea.vmem %s4, %s1354
      // Predicated region
      $region37: #{depthwise_conv_forward.1} parent=35 // pred_check
        %p1356 = pneg %p153
      $region38: #{depthwise_conv_forward.1} parent=35 // pred_check_branch
        %1358 = sbr.rel (%p1356) target = $region40
      $region39: #{depthwise_conv_forward.1} parent=35 // pred_region
        _
      $region40: #{depthwise_conv_forward.1} parent=35 // pred_fallthru
        _
    $region36: #{depthwise_conv_forward.1} parent=5 // pred_fallthru
      _
    %p1359 = scmp.le.s32.totalorder 2, %s10
    // Predicated region
    $region41: #{depthwise_conv_forward.1} parent=5 // pred_check
      %p1360 = pneg %p1359
    $region42: #{depthwise_conv_forward.1} parent=5 // pred_check_branch
      %1362 = sbr.rel (%p1360) target = $region44
    $region43: #{depthwise_conv_forward.1} parent=5 // pred_region
      %s1363 = ssub.s32 %s10, 2
      // Predicated region
      $region45: #{depthwise_conv_forward.1} parent=43 // pred_check
        %p1364 = pneg %p159
      $region46: #{depthwise_conv_forward.1} parent=43 // pred_check_branch
        %1366 = sbr.rel (%p1364) target = $region48
      $region47: #{depthwise_conv_forward.1} parent=43 // pred_region
        %p1367 = scmp.lt.s32.totalorder %s22, 1
        %s1368 = scalar_select %p1367, %s22, 1
        %p1369 = scmp.lt.s32.totalorder %s21, 0
        %s1370 = scalar_select %p1369, %s21, 0
        %s1371 = smul.addr %s1368, 32
        %s1372 = sadd.s32 %s1370, %s1371
        %s1373 = smul.addr %s1372, 8
        %s1374 = scalar_lea.vmem %s4, %s1373
      $region48: #{depthwise_conv_forward.1} parent=43 // pred_fallthru
        _
    $region44: #{depthwise_conv_forward.1} parent=5 // pred_fallthru
      _
  $region6: #{depthwise_conv_forward.1} parent=0 // loop_footer
    %s14 = sadd.s32 1, %s10
  $region7: #{depthwise_conv_forward.1} parent=0 // loop_footer_branch
    %9 = sbr.rel target = $region3
  $region8: #{depthwise_conv_forward.1} parent=0 // loop_exit
    _

</llo_original>
